<compile_context>
chip_gen: v7x
topology: tpu7x:2x2x1
jax: 0.10.0
libtpu: 0.0.40
codegen_flags: <defaults>
</compile_context>

<pallas_src>
import functools
import math

import jax
import jax.numpy as jnp
import numpy as np
from jax.experimental import pallas as pl
from jax.experimental.pallas import tpu as pltpu


# ----------------------------- Pallas kernel ------------------------------ #
def _conv_bn_relu_kernel(x_ref, w_ref, b_ref, o_ref, *, th, wo):
    """Fused conv(3x3,s2,p1) + BN(eval) + ReLU for one (image, row-tile).

    x_ref: (Hs, Ws, 4*Cin)  space-to-depth image (whole image, VMEM resident)
    w_ref: (4, 4*Cin, N)    2x2-conv weights with the BN scale folded in (bf16)
    b_ref: (1, N)           folded BN bias (f32)
    o_ref: (th*wo, N)       output row tile (rows = flattened (h, w) pixels)
    """
    r = pl.program_id(1)
    row0 = r * th
    c4 = x_ref.shape[-1]
    n = o_ref.shape[-1]

    acc = jnp.zeros((th * wo, n), jnp.float32)
    for a in (0, 1):            # row offset of the 2x2 window over s2d cells
        for b in (0, 1):        # col offset of the 2x2 window over s2d cells
            tap = x_ref[pl.ds(row0 + a, th), pl.ds(b, wo), :]   # (th, wo, 4C)
            tap = tap.reshape(th * wo, c4)
            acc = acc + jnp.dot(tap, w_ref[2 * a + b],
                                preferred_element_type=jnp.float32)
    o_ref[...] = jnp.maximum(acc + b_ref[...], 0.0).astype(o_ref.dtype)


# ------------------------------- JAX glue --------------------------------- #
def _round_up(x, m):
    return ((x + m - 1) // m) * m


def _pick_row_tile(ho, wo_p, target_rows):
    """Rows-per-tile th and padded Ho (multiple of th)."""
    th = max(1, min(ho, -(-target_rows // wo_p)))
    if th >= ho:
        return ho, ho
    return th, _round_up(ho, th)


def _pad_space_to_depth(x_nhwc, ho_p, wo_p, dtype):
    """Zero-pad for the 3x3/s2/p1 conv and space-to-depth by 2.

    Returns [B, ho_p+1, wo_p+1, 4*C] where entry (b, i, j, (p*2+q)*C + c)
    equals the padded input at (b, 2i+p, 2j+q, c).
    """
    B, H, W, C = x_nhwc.shape
    Hp = 2 * (ho_p + 1)
    Wp = 2 * (wo_p + 1)
    xp = jnp.pad(x_nhwc, ((0, 0), (1, Hp - H - 1), (1, Wp - W - 1), (0, 0)))
    xs = xp.reshape(B, Hp // 2, 2, Wp // 2, 2, C)
    xs = xs.transpose(0, 1, 3, 2, 4, 5).reshape(B, Hp // 2, Wp // 2, 4 * C)
    return xs.astype(dtype)


def _expand_weight(w_oihw, scale, dtype):
    """Torch [N, Cin, 3, 3] weight -> [4, 4*Cin, N] weights of the equivalent
    2x2 stride-1 conv over the space-to-depth input, BN scale folded in."""
    n, cin = w_oihw.shape[0], w_oihw.shape[1]
    w_hwio = jnp.transpose(w_oihw, (2, 3, 1, 0)) * scale            # [3,3,Cin,N]
    w_hwio = jnp.pad(w_hwio, ((0, 1), (0, 1), (0, 0), (0, 0)))      # taps 3 -> 0
    # dh = 2a + p, dw = 2b + q : [a,p,b,q,c,n] -> [a,b,p,q,c,n]
    w2 = w_hwio.reshape(2, 2, 2, 2, cin, n).transpose(0, 2, 1, 3, 4, 5)
    return w2.reshape(4, 4 * cin, n).astype(dtype)


def conv3x3s2_bn_relu(x_nhwc, w_oihw, gamma, beta, mean, var, *, eps=1e-4,
                      compute_dtype=jnp.bfloat16, target_rows=1024):
    """One Conv2d(3, 2, 1, bias=False) + BatchNorm2d(eval) + ReLU stage."""
    B, H, W, Cin = x_nhwc.shape
    N = w_oihw.shape[0]
    Ho = (H - 1) // 2 + 1
    Wo = (W - 1) // 2 + 1
    wo_p = _round_up(Wo, 8)                       # sublane-friendly width
    th, ho_p = _pick_row_tile(Ho, wo_p, target_rows)
    R = ho_p // th
    m_tile = th * wo_p
    c4 = 4 * Cin
    hs, ws = ho_p + 1, wo_p + 1

    xs = _pad_space_to_depth(x_nhwc, ho_p, wo_p, compute_dtype)     # [B,hs,ws,c4]
    inv_std = 1.0 / jnp.sqrt(var.astype(jnp.float32) + eps)
    scale = gamma.astype(jnp.float32) * inv_std
    w2 = _expand_weight(w_oihw, scale, compute_dtype)               # [4,c4,N]
    bias = (beta.astype(jnp.float32)
            - mean.astype(jnp.float32) * scale).reshape(1, N)

    kernel = functools.partial(_conv_bn_relu_kernel, th=th, wo=wo_p)
    out = pl.pallas_call(
        kernel,
        out_shape=jax.ShapeDtypeStruct((B, ho_p * wo_p, N), jnp.float32),
        grid=(B, R),
        in_specs=[
            # Whole space-to-depth image of batch element b; the block index is
            # constant across r, so it is copied HBM->VMEM once per image.
            pl.BlockSpec((None, hs, ws, c4), lambda b, r: (b, 0, 0, 0)),
            pl.BlockSpec((4, c4, N), lambda b, r: (0, 0, 0)),
            pl.BlockSpec((1, N), lambda b, r: (0, 0)),
        ],
        out_specs=pl.BlockSpec((None, m_tile, N), lambda b, r: (b, r, 0)),
        compiler_params=pltpu.CompilerParams(
            dimension_semantics=("parallel", "parallel")),
    )(xs, w2, bias)

    out = out.reshape(B, ho_p, wo_p, N)[:, :Ho, :Wo, :]
    return out


def patch_embed_forward(x_nchw, params, *, compute_dtype=jnp.bfloat16):
    """Equivalent to PatchEmbed.forward (proj = Identity, two conv_down stages)."""
    x = jnp.transpose(x_nchw, (0, 2, 3, 1))       # NCHW -> NHWC
    x = conv3x3s2_bn_relu(x, params["w1"], params["g1"], params["b1"],
                          params["m1"], params["v1"], compute_dtype=compute_dtype)
    x = conv3x3s2_bn_relu(x, params["w2"], params["g2"], params["b2"],
                          params["m2"], params["v2"], compute_dtype=compute_dtype)
    return jnp.transpose(x, (0, 3, 1, 2))         # NHWC -> NCHW


# ----------------------------- reference (JAX) ----------------------------- #
def _ref_forward(x_nchw, params, eps=1e-4, compute_dtype=jnp.float32):
    def layer(x, w, g, b, m, v):
        s = g / jnp.sqrt(v + eps)
        w_f = (w * s[:, None, None, None]).astype(compute_dtype)
        y = jax.lax.conv_general_dilated(
            x.astype(compute_dtype), w_f,
            window_strides=(2, 2), padding=((1, 1), (1, 1)),
            dimension_numbers=("NCHW", "OIHW", "NCHW"),
            preferred_element_type=jnp.float32,
            precision=jax.lax.Precision.HIGHEST)
        return jnp.maximum(y + (b - m * s)[None, :, None, None], 0.0)

    x = layer(x_nchw, params["w1"], params["g1"], params["b1"],
              params["m1"], params["v1"])
    x = layer(x, params["w2"], params["g2"], params["b2"],
              params["m2"], params["v2"])
    return x


# --------------------------------- main ------------------------------------ #
def _init_params(key, in_chans, in_dim, dim):
    ks = jax.random.split(key, 8)
    fan1 = in_chans * 9
    fan2 = in_dim * 9
    return {
        "w1": jax.random.normal(ks[0], (in_dim, in_chans, 3, 3), jnp.float32)
              / np.sqrt(fan1),
        "g1": 1.0 + 0.1 * jax.random.normal(ks[1], (in_dim,), jnp.float32),
        "b1": 0.1 * jax.random.normal(ks[2], (in_dim,), jnp.float32),
        "m1": 0.1 * jax.random.normal(ks[3], (in_dim,), jnp.float32),
        "v1": jnp.abs(jax.random.normal(ks[4], (in_dim,), jnp.float32)) + 0.5,
        "w2": jax.random.normal(ks[5], (dim, in_dim, 3, 3), jnp.float32)
              / np.sqrt(fan2),
        "g2": 1.0 + 0.1 * jax.random.normal(ks[6], (dim,), jnp.float32),
        "b2": 0.1 * jax.random.normal(ks[7], (dim,), jnp.float32),
        "m2": jnp.zeros((dim,), jnp.float32),
        "v2": jnp.ones((dim,), jnp.float32),
    }


if __name__ == "__main__":
    # Small shapes consistent with the module: PatchEmbed(in_chans=4, in_dim=32, dim=32)
    B, C, H, W = 2, 4, 16, 16
    in_dim, dim = 32, 32

    key = jax.random.PRNGKey(0)
    kx, kp = jax.random.split(key)
    x = jax.random.normal(kx, (B, C, H, W), jnp.float32)
    params = _init_params(kp, C, in_dim, dim)

    fwd = jax.jit(patch_embed_forward)
    out = jax.block_until_ready(fwd(x, params))
    assert out.shape == (B, dim, H // 4, W // 4), out.shape

    # Tight check vs. a reference using the same bf16-operand / f32-accum math.
    ref_bf16 = jax.block_until_ready(
        _ref_forward(x, params, compute_dtype=jnp.bfloat16))
    np.testing.assert_allclose(np.asarray(out), np.asarray(ref_bf16),
                               rtol=2e-2, atol=2e-2)
    # Looser check vs. the full-f32 reference (original module semantics).
    ref_f32 = jax.block_until_ready(
        _ref_forward(x, params, compute_dtype=jnp.float32))
    np.testing.assert_allclose(np.asarray(out), np.asarray(ref_f32),
                               rtol=6e-2, atol=6e-2)
    print("KERNEL_OK")
</pallas_src>

<mosaic_0001>
module attributes {stable_mosaic.version = 11 : i64} {
  func.func @_conv_bn_relu_kernel(%arg0: i32, %arg1: i32, %arg2: memref<1x9x9x16xbf16, #tpu.memory_space<vmem>>, %arg3: memref<4x16x32xbf16, #tpu.memory_space<vmem>>, %arg4: memref<1x32xf32, #tpu.memory_space<vmem>>, %arg5: memref<1x64x32xf32, #tpu.memory_space<vmem>>) attributes {dimension_semantics = [#tpu.dimension_semantics<parallel>, #tpu.dimension_semantics<parallel>], iteration_bounds = array<i64: 2, 1>, scalar_prefetch = 0 : i64, scratch_operands = 0 : i64, tpu.core_type = #tpu.core_type<tc>, window_params = [{transform_indices = @transform_0, window_bounds = array<i64: 1, 9, 9, 16>}, {pipeline_mode = #tpu.pipeline_mode<synchronous>, transform_indices = @transform_1, window_bounds = array<i64: 4, 16, 32>}, {pipeline_mode = #tpu.pipeline_mode<synchronous>, transform_indices = @transform_2, window_bounds = array<i64: 1, 32>}, {transform_indices = @transform_3, window_bounds = array<i64: 1, 64, 32>}]} {
    %c8_i32 = arith.constant 8 : i32
    %0 = arith.muli %arg1, %c8_i32 : i32
    %cst = arith.constant 0.000000e+00 : f32
    %1 = vector.broadcast %cst : f32 to vector<64x32xf32>
    %c0_i32 = arith.constant 0 : i32
    %2 = arith.addi %0, %c0_i32 : i32
    %c0 = arith.constant 0 : index
    %3 = arith.index_cast %2 : i32 to index
    %c0_0 = arith.constant 0 : index
    %c0_1 = arith.constant 0 : index
    %4 = vector.load %arg2[%c0, %3, %c0_0, %c0_1] : memref<1x9x9x16xbf16, #tpu.memory_space<vmem>>, vector<1x8x8x16xbf16>
    %5 = vector.shape_cast %4 : vector<1x8x8x16xbf16> to vector<8x8x16xbf16>
    %6 = vector.shape_cast %5 : vector<8x8x16xbf16> to vector<64x16xbf16>
    %c0_2 = arith.constant 0 : index
    %c0_3 = arith.constant 0 : index
    %c0_4 = arith.constant 0 : index
    %7 = vector.load %arg3[%c0_2, %c0_3, %c0_4] : memref<4x16x32xbf16, #tpu.memory_space<vmem>>, vector<1x16x32xbf16>
    %8 = vector.shape_cast %7 : vector<1x16x32xbf16> to vector<16x32xbf16>
    %cst_5 = arith.constant dense<0.000000e+00> : vector<64x32xf32>
    %9 = tpu.matmul %6, %8, %cst_5 {dimension_numbers = #tpu.dot_dimension_numbers<[1], [0], [0], [1], [0, 0, 1, 1], [], []>} : vector<64x16xbf16>, vector<16x32xbf16>, vector<64x32xf32> -> vector<64x32xf32>
    %10 = arith.addf %1, %9 : vector<64x32xf32>
    %c0_i32_6 = arith.constant 0 : i32
    %11 = arith.addi %0, %c0_i32_6 : i32
    %c0_7 = arith.constant 0 : index
    %12 = arith.index_cast %11 : i32 to index
    %c1 = arith.constant 1 : index
    %c0_8 = arith.constant 0 : index
    %13 = vector.load %arg2[%c0_7, %12, %c1, %c0_8] : memref<1x9x9x16xbf16, #tpu.memory_space<vmem>>, vector<1x8x8x16xbf16>
    %14 = vector.shape_cast %13 : vector<1x8x8x16xbf16> to vector<8x8x16xbf16>
    %15 = vector.shape_cast %14 : vector<8x8x16xbf16> to vector<64x16xbf16>
    %c1_9 = arith.constant 1 : index
    %c0_10 = arith.constant 0 : index
    %c0_11 = arith.constant 0 : index
    %16 = vector.load %arg3[%c1_9, %c0_10, %c0_11] : memref<4x16x32xbf16, #tpu.memory_space<vmem>>, vector<1x16x32xbf16>
    %17 = vector.shape_cast %16 : vector<1x16x32xbf16> to vector<16x32xbf16>
    %cst_12 = arith.constant dense<0.000000e+00> : vector<64x32xf32>
    %18 = tpu.matmul %15, %17, %cst_12 {dimension_numbers = #tpu.dot_dimension_numbers<[1], [0], [0], [1], [0, 0, 1, 1], [], []>} : vector<64x16xbf16>, vector<16x32xbf16>, vector<64x32xf32> -> vector<64x32xf32>
    %19 = arith.addf %10, %18 : vector<64x32xf32>
    %c1_i32 = arith.constant 1 : i32
    %20 = arith.addi %0, %c1_i32 : i32
    %c0_13 = arith.constant 0 : index
    %21 = arith.index_cast %20 : i32 to index
    %c0_14 = arith.constant 0 : index
    %c0_15 = arith.constant 0 : index
    %22 = vector.load %arg2[%c0_13, %21, %c0_14, %c0_15] : memref<1x9x9x16xbf16, #tpu.memory_space<vmem>>, vector<1x8x8x16xbf16>
    %23 = vector.shape_cast %22 : vector<1x8x8x16xbf16> to vector<8x8x16xbf16>
    %24 = vector.shape_cast %23 : vector<8x8x16xbf16> to vector<64x16xbf16>
    %c2 = arith.constant 2 : index
    %c0_16 = arith.constant 0 : index
    %c0_17 = arith.constant 0 : index
    %25 = vector.load %arg3[%c2, %c0_16, %c0_17] : memref<4x16x32xbf16, #tpu.memory_space<vmem>>, vector<1x16x32xbf16>
    %26 = vector.shape_cast %25 : vector<1x16x32xbf16> to vector<16x32xbf16>
    %cst_18 = arith.constant dense<0.000000e+00> : vector<64x32xf32>
    %27 = tpu.matmul %24, %26, %cst_18 {dimension_numbers = #tpu.dot_dimension_numbers<[1], [0], [0], [1], [0, 0, 1, 1], [], []>} : vector<64x16xbf16>, vector<16x32xbf16>, vector<64x32xf32> -> vector<64x32xf32>
    %28 = arith.addf %19, %27 : vector<64x32xf32>
    %c1_i32_19 = arith.constant 1 : i32
    %29 = arith.addi %0, %c1_i32_19 : i32
    %c0_20 = arith.constant 0 : index
    %30 = arith.index_cast %29 : i32 to index
    %c1_21 = arith.constant 1 : index
    %c0_22 = arith.constant 0 : index
    %31 = vector.load %arg2[%c0_20, %30, %c1_21, %c0_22] : memref<1x9x9x16xbf16, #tpu.memory_space<vmem>>, vector<1x8x8x16xbf16>
    %32 = vector.shape_cast %31 : vector<1x8x8x16xbf16> to vector<8x8x16xbf16>
    %33 = vector.shape_cast %32 : vector<8x8x16xbf16> to vector<64x16xbf16>
    %c3 = arith.constant 3 : index
    %c0_23 = arith.constant 0 : index
    %c0_24 = arith.constant 0 : index
    %34 = vector.load %arg3[%c3, %c0_23, %c0_24] : memref<4x16x32xbf16, #tpu.memory_space<vmem>>, vector<1x16x32xbf16>
    %35 = vector.shape_cast %34 : vector<1x16x32xbf16> to vector<16x32xbf16>
    %cst_25 = arith.constant dense<0.000000e+00> : vector<64x32xf32>
    %36 = tpu.matmul %33, %35, %cst_25 {dimension_numbers = #tpu.dot_dimension_numbers<[1], [0], [0], [1], [0, 0, 1, 1], [], []>} : vector<64x16xbf16>, vector<16x32xbf16>, vector<64x32xf32> -> vector<64x32xf32>
    %37 = arith.addf %28, %36 : vector<64x32xf32>
    %c0_26 = arith.constant 0 : index
    %c0_27 = arith.constant 0 : index
    %38 = vector.load %arg4[%c0_26, %c0_27] : memref<1x32xf32, #tpu.memory_space<vmem>>, vector<1x32xf32>
    %39 = vector.broadcast %38 : vector<1x32xf32> to vector<64x32xf32>
    %40 = arith.addf %37, %39 : vector<64x32xf32>
    %cst_28 = arith.constant 0.000000e+00 : f32
    %41 = vector.broadcast %cst_28 : f32 to vector<64x32xf32>
    %42 = arith.maximumf %40, %41 : vector<64x32xf32>
    %c0_29 = arith.constant 0 : index
    %c0_30 = arith.constant 0 : index
    %c0_31 = arith.constant 0 : index
    %43 = vector.load %arg5[%c0_29, %c0_30, %c0_31] : memref<1x64x32xf32, #tpu.memory_space<vmem>>, vector<1x64x32xf32>
    %44 = vector.shape_cast %43 : vector<1x64x32xf32> to vector<64x32xf32>
    %45 = vector.shape_cast %42 : vector<64x32xf32> to vector<1x64x32xf32>
    tpu.vector_store %arg5[%c0_29, %c0_30, %c0_31], %45 {strides = array<i32>} : memref<1x64x32xf32, #tpu.memory_space<vmem>>, vector<1x64x32xf32>,
    return
  }
  func.func @transform_0(%arg0: i32, %arg1: i32) -> (i32, i32, i32, i32) {
    %c0_i32 = arith.constant 0 : i32
    %c0_i32_0 = arith.constant 0 : i32
    %c0_i32_1 = arith.constant 0 : i32
    %c0_i32_2 = arith.constant 0 : i32
    return %arg0, %c0_i32, %c0_i32_0, %c0_i32_1 : i32, i32, i32, i32
  }
  func.func @transform_1(%arg0: i32, %arg1: i32) -> (i32, i32, i32) {
    %c0_i32 = arith.constant 0 : i32
    %c0_i32_0 = arith.constant 0 : i32
    %c0_i32_1 = arith.constant 0 : i32
    %c0_i32_2 = arith.constant 0 : i32
    return %c0_i32, %c0_i32_0, %c0_i32_1 : i32, i32, i32
  }
  func.func @transform_2(%arg0: i32, %arg1: i32) -> (i32, i32) {
    %c0_i32 = arith.constant 0 : i32
    %c0_i32_0 = arith.constant 0 : i32
    %c0_i32_1 = arith.constant 0 : i32
    return %c0_i32, %c0_i32_0 : i32, i32
  }
  func.func @transform_3(%arg0: i32, %arg1: i32) -> (i32, i32, i32) {
    %c0_i32 = arith.constant 0 : i32
    %c0_i32_0 = arith.constant 0 : i32
    return %arg0, %arg1, %c0_i32 : i32, i32, i32
  }
}

module attributes {stable_mosaic.version = 11 : i64} {
  func.func @_conv_bn_relu_kernel(%arg0: i32, %arg1: i32, %arg2: memref<1x5x9x128xbf16, #tpu.memory_space<vmem>>, %arg3: memref<4x128x32xbf16, #tpu.memory_space<vmem>>, %arg4: memref<1x32xf32, #tpu.memory_space<vmem>>, %arg5: memref<1x32x32xf32, #tpu.memory_space<vmem>>) attributes {dimension_semantics = [#tpu.dimension_semantics<parallel>, #tpu.dimension_semantics<parallel>], iteration_bounds = array<i64: 2, 1>, scalar_prefetch = 0 : i64, scratch_operands = 0 : i64, tpu.core_type = #tpu.core_type<tc>, window_params = [{transform_indices = @transform_0, window_bounds = array<i64: 1, 5, 9, 128>}, {pipeline_mode = #tpu.pipeline_mode<synchronous>, transform_indices = @transform_1, window_bounds = array<i64: 4, 128, 32>}, {pipeline_mode = #tpu.pipeline_mode<synchronous>, transform_indices = @transform_2, window_bounds = array<i64: 1, 32>}, {transform_indices = @transform_3, window_bounds = array<i64: 1, 32, 32>}]} {
    %c4_i32 = arith.constant 4 : i32
    %0 = arith.muli %arg1, %c4_i32 : i32
    %cst = arith.constant 0.000000e+00 : f32
    %1 = vector.broadcast %cst : f32 to vector<32x32xf32>
    %c0_i32 = arith.constant 0 : i32
    %2 = arith.addi %0, %c0_i32 : i32
    %c0 = arith.constant 0 : index
    %3 = arith.index_cast %2 : i32 to index
    %c0_0 = arith.constant 0 : index
    %c0_1 = arith.constant 0 : index
    %4 = vector.load %arg2[%c0, %3, %c0_0, %c0_1] : memref<1x5x9x128xbf16, #tpu.memory_space<vmem>>, vector<1x4x8x128xbf16>
    %5 = vector.shape_cast %4 : vector<1x4x8x128xbf16> to vector<4x8x128xbf16>
    %6 = vector.shape_cast %5 : vector<4x8x128xbf16> to vector<32x128xbf16>
    %c0_2 = arith.constant 0 : index
    %c0_3 = arith.constant 0 : index
    %c0_4 = arith.constant 0 : index
    %7 = vector.load %arg3[%c0_2, %c0_3, %c0_4] : memref<4x128x32xbf16, #tpu.memory_space<vmem>>, vector<1x128x32xbf16>
    %8 = vector.shape_cast %7 : vector<1x128x32xbf16> to vector<128x32xbf16>
    %cst_5 = arith.constant dense<0.000000e+00> : vector<32x32xf32>
    %9 = tpu.matmul %6, %8, %cst_5 {dimension_numbers = #tpu.dot_dimension_numbers<[1], [0], [0], [1], [0, 0, 1, 1], [], []>} : vector<32x128xbf16>, vector<128x32xbf16>, vector<32x32xf32> -> vector<32x32xf32>
    %10 = arith.addf %1, %9 : vector<32x32xf32>
    %c0_i32_6 = arith.constant 0 : i32
    %11 = arith.addi %0, %c0_i32_6 : i32
    %c0_7 = arith.constant 0 : index
    %12 = arith.index_cast %11 : i32 to index
    %c1 = arith.constant 1 : index
    %c0_8 = arith.constant 0 : index
    %13 = vector.load %arg2[%c0_7, %12, %c1, %c0_8] : memref<1x5x9x128xbf16, #tpu.memory_space<vmem>>, vector<1x4x8x128xbf16>
    %14 = vector.shape_cast %13 : vector<1x4x8x128xbf16> to vector<4x8x128xbf16>
    %15 = vector.shape_cast %14 : vector<4x8x128xbf16> to vector<32x128xbf16>
    %c1_9 = arith.constant 1 : index
    %c0_10 = arith.constant 0 : index
    %c0_11 = arith.constant 0 : index
    %16 = vector.load %arg3[%c1_9, %c0_10, %c0_11] : memref<4x128x32xbf16, #tpu.memory_space<vmem>>, vector<1x128x32xbf16>
    %17 = vector.shape_cast %16 : vector<1x128x32xbf16> to vector<128x32xbf16>
    %cst_12 = arith.constant dense<0.000000e+00> : vector<32x32xf32>
    %18 = tpu.matmul %15, %17, %cst_12 {dimension_numbers = #tpu.dot_dimension_numbers<[1], [0], [0], [1], [0, 0, 1, 1], [], []>} : vector<32x128xbf16>, vector<128x32xbf16>, vector<32x32xf32> -> vector<32x32xf32>
    %19 = arith.addf %10, %18 : vector<32x32xf32>
    %c1_i32 = arith.constant 1 : i32
    %20 = arith.addi %0, %c1_i32 : i32
    %c0_13 = arith.constant 0 : index
    %21 = arith.index_cast %20 : i32 to index
    %c0_14 = arith.constant 0 : index
    %c0_15 = arith.constant 0 : index
    %22 = vector.load %arg2[%c0_13, %21, %c0_14, %c0_15] : memref<1x5x9x128xbf16, #tpu.memory_space<vmem>>, vector<1x4x8x128xbf16>
    %23 = vector.shape_cast %22 : vector<1x4x8x128xbf16> to vector<4x8x128xbf16>
    %24 = vector.shape_cast %23 : vector<4x8x128xbf16> to vector<32x128xbf16>
    %c2 = arith.constant 2 : index
    %c0_16 = arith.constant 0 : index
    %c0_17 = arith.constant 0 : index
    %25 = vector.load %arg3[%c2, %c0_16, %c0_17] : memref<4x128x32xbf16, #tpu.memory_space<vmem>>, vector<1x128x32xbf16>
    %26 = vector.shape_cast %25 : vector<1x128x32xbf16> to vector<128x32xbf16>
    %cst_18 = arith.constant dense<0.000000e+00> : vector<32x32xf32>
    %27 = tpu.matmul %24, %26, %cst_18 {dimension_numbers = #tpu.dot_dimension_numbers<[1], [0], [0], [1], [0, 0, 1, 1], [], []>} : vector<32x128xbf16>, vector<128x32xbf16>, vector<32x32xf32> -> vector<32x32xf32>
    %28 = arith.addf %19, %27 : vector<32x32xf32>
    %c1_i32_19 = arith.constant 1 : i32
    %29 = arith.addi %0, %c1_i32_19 : i32
    %c0_20 = arith.constant 0 : index
    %30 = arith.index_cast %29 : i32 to index
    %c1_21 = arith.constant 1 : index
    %c0_22 = arith.constant 0 : index
    %31 = vector.load %arg2[%c0_20, %30, %c1_21, %c0_22] : memref<1x5x9x128xbf16, #tpu.memory_space<vmem>>, vector<1x4x8x128xbf16>
    %32 = vector.shape_cast %31 : vector<1x4x8x128xbf16> to vector<4x8x128xbf16>
    %33 = vector.shape_cast %32 : vector<4x8x128xbf16> to vector<32x128xbf16>
    %c3 = arith.constant 3 : index
    %c0_23 = arith.constant 0 : index
    %c0_24 = arith.constant 0 : index
    %34 = vector.load %arg3[%c3, %c0_23, %c0_24] : memref<4x128x32xbf16, #tpu.memory_space<vmem>>, vector<1x128x32xbf16>
    %35 = vector.shape_cast %34 : vector<1x128x32xbf16> to vector<128x32xbf16>
    %cst_25 = arith.constant dense<0.000000e+00> : vector<32x32xf32>
    %36 = tpu.matmul %33, %35, %cst_25 {dimension_numbers = #tpu.dot_dimension_numbers<[1], [0], [0], [1], [0, 0, 1, 1], [], []>} : vector<32x128xbf16>, vector<128x32xbf16>, vector<32x32xf32> -> vector<32x32xf32>
    %37 = arith.addf %28, %36 : vector<32x32xf32>
    %c0_26 = arith.constant 0 : index
    %c0_27 = arith.constant 0 : index
    %38 = vector.load %arg4[%c0_26, %c0_27] : memref<1x32xf32, #tpu.memory_space<vmem>>, vector<1x32xf32>
    %39 = vector.broadcast %38 : vector<1x32xf32> to vector<32x32xf32>
    %40 = arith.addf %37, %39 : vector<32x32xf32>
    %cst_28 = arith.constant 0.000000e+00 : f32
    %41 = vector.broadcast %cst_28 : f32 to vector<32x32xf32>
    %42 = arith.maximumf %40, %41 : vector<32x32xf32>
    %c0_29 = arith.constant 0 : index
    %c0_30 = arith.constant 0 : index
    %c0_31 = arith.constant 0 : index
    %43 = vector.load %arg5[%c0_29, %c0_30, %c0_31] : memref<1x32x32xf32, #tpu.memory_space<vmem>>, vector<1x32x32xf32>
    %44 = vector.shape_cast %43 : vector<1x32x32xf32> to vector<32x32xf32>
    %45 = vector.shape_cast %42 : vector<32x32xf32> to vector<1x32x32xf32>
    tpu.vector_store %arg5[%c0_29, %c0_30, %c0_31], %45 {strides = array<i32>} : memref<1x32x32xf32, #tpu.memory_space<vmem>>, vector<1x32x32xf32>,
    return
  }
  func.func @transform_0(%arg0: i32, %arg1: i32) -> (i32, i32, i32, i32) {
    %c0_i32 = arith.constant 0 : i32
    %c0_i32_0 = arith.constant 0 : i32
    %c0_i32_1 = arith.constant 0 : i32
    %c0_i32_2 = arith.constant 0 : i32
    return %arg0, %c0_i32, %c0_i32_0, %c0_i32_1 : i32, i32, i32, i32
  }
  func.func @transform_1(%arg0: i32, %arg1: i32) -> (i32, i32, i32) {
    %c0_i32 = arith.constant 0 : i32
    %c0_i32_0 = arith.constant 0 : i32
    %c0_i32_1 = arith.constant 0 : i32
    %c0_i32_2 = arith.constant 0 : i32
    return %c0_i32, %c0_i32_0, %c0_i32_1 : i32, i32, i32
  }
  func.func @transform_2(%arg0: i32, %arg1: i32) -> (i32, i32) {
    %c0_i32 = arith.constant 0 : i32
    %c0_i32_0 = arith.constant 0 : i32
    %c0_i32_1 = arith.constant 0 : i32
    return %c0_i32, %c0_i32_0 : i32, i32
  }
  func.func @transform_3(%arg0: i32, %arg1: i32) -> (i32, i32, i32) {
    %c0_i32 = arith.constant 0 : i32
    %c0_i32_0 = arith.constant 0 : i32
    return %arg0, %arg1, %c0_i32 : i32, i32, i32
  }
}

</mosaic_0001>

<llo_original>
// kernel: patch_embed_forward.2
$region0: #{patch_embed_forward.2}
  #allocation0 [shape = 'u32[]', space=smem, size = 0x4, offset = 0x4, fixed_abs, tag = 'smem constant byte address 0x4 - core index']
  #allocation1 [shape = 'u32[144,128]{1,0:T(1,128)}', space=vmem, size = 0x12000, scoped, tag = 'internal scratch']
  %s0 = inlined_call_operand.vmem [shape: bf16[2,9,9,16], index: 0, kind: input, shape index: {}]
  %s1 = inlined_call_operand.vmem [shape: bf16[4,16,32], index: 1, kind: input, shape index: {}]
  %s2 = inlined_call_operand.vmem [shape: f32[1,32], index: 2, kind: input, shape index: {}]
  %s3 = inlined_call_operand.vmem [shape: f32[2,64,32], index: 3, kind: output, shape index: {}]
  %s4 = sld [smem:[#allocation0]]
  $region45: #{patch_embed_forward.2} parent=0
    _
  %s6 = ssub.s32 1, %s4
  %s7 = scalar_select 0, %s6, %s4
  loop: start=0, step=1, limit=4
  $region2: #{patch_embed_forward.2} parent=0 // loop_pre_header
    _
  $region3: #{patch_embed_forward.2} parent=0 // loop_header
    %s9 = sphi 0, %s13
    %p10 = scmp.ge.s32.totalorder %s9, 4
    %s16 = sphi 0, %s28
    %s17 = sphi 0, %s24
    %s18 = sphi 0, %s16
    %s19 = sphi 0, %s17
    %s20 = sphi 0, %s18
    %s21 = sphi 0, %s19
    %s31 = sphi 0, %s33
    %s34 = sphi 0, %s31
    %s35 = sphi 0, %s34
    %s51 = sphi 0, %s35
    %s55 = sphi 0, %s55
    %s57 = sphi 0, %s55
    %s58 = sphi 0, %s57
    %s72 = sphi 0, %s58
    %s76 = sphi 0, %s76
    %s78 = sphi 0, %s76
    %s79 = sphi 0, %s78
    %s93 = sphi 0, %s79
    %s101 = sphi 0, %s103
    %s104 = sphi 0, %s101
    %s105 = sphi 0, %s104
    %s121 = sphi 0, %s105
  $region4: #{patch_embed_forward.2} parent=0 // loop_header_branch
    %12 = sbr.rel (%p10) target = $region8
  $region5: #{patch_embed_forward.2} parent=0 // loop_body
    %s14 = ssub.s32 %s9, 1
    %s15 = ssub.s32 %s9, 2
    %s22 = sadd.s32 1, %s17
    %p23 = scmp.ge.s32.totalorder %s22, 1
    %s24 = scalar_select %p23, 0, %s22
    %s25 = sadd.s32 1, %s16
    %s26 = scalar_select %p23, %s25, %s16
    %p27 = scmp.ge.s32.totalorder %s26, 2
    %s28 = scalar_select %p27, 0, %s26
    %s29 = ssub.s32 %s16, %s28
    %p30 = scmp.eq.s32.totalorder %s29, 0
    %s32 = sadd.s32 %s31, 1
    %s33 = scalar_select %p30, %s31, %s32
    %p36 = pneg %p30
    %p37 = scmp.eq.s32.totalorder %s9, 1
    %p38 = por %p36, %p37
    %p39 = scmp.ne.s32.totalorder %s31, %s34
    %p40 = scmp.eq.s32.totalorder %s9, 0
    %p41 = por %p39, %p40
    %p42 = scmp.ne.s32.totalorder %s31, %s34
    %p43 = scmp.eq.s32.totalorder %s14, 1
    %p44 = por %p42, %p43
    %p45 = scmp.ne.s32.totalorder %s34, %s35
    %p46 = scmp.eq.s32.totalorder %s14, 0
    %p47 = por %p45, %p46
    %p48 = scmp.ne.s32.totalorder %s34, %s35
    %p49 = scmp.eq.s32.totalorder %s15, 1
    %p50 = por %p48, %p49
    %p52 = scmp.ne.s32.totalorder %s35, %s51
    %p53 = scmp.eq.s32.totalorder %s15, 0
    %p54 = por %p52, %p53
    %s56 = sadd.s32 %s55, 1
    %p59 = scmp.eq.s32.totalorder %s9, 1
    %p60 = scmp.ne.s32.totalorder %s55, %s57
    %p61 = scmp.eq.s32.totalorder %s9, 0
    %p62 = por %p60, %p61
    %p63 = scmp.ne.s32.totalorder %s55, %s57
    %p64 = scmp.eq.s32.totalorder %s14, 1
    %p65 = por %p63, %p64
    %p66 = scmp.ne.s32.totalorder %s57, %s58
    %p67 = scmp.eq.s32.totalorder %s14, 0
    %p68 = por %p66, %p67
    %p69 = scmp.ne.s32.totalorder %s57, %s58
    %p70 = scmp.eq.s32.totalorder %s15, 1
    %p71 = por %p69, %p70
    %p73 = scmp.ne.s32.totalorder %s58, %s72
    %p74 = scmp.eq.s32.totalorder %s15, 0
    %p75 = por %p73, %p74
    %s77 = sadd.s32 %s76, 1
    %p80 = scmp.eq.s32.totalorder %s9, 1
    %p81 = scmp.ne.s32.totalorder %s76, %s78
    %p82 = scmp.eq.s32.totalorder %s9, 0
    %p83 = por %p81, %p82
    %p84 = scmp.ne.s32.totalorder %s76, %s78
    %p85 = scmp.eq.s32.totalorder %s14, 1
    %p86 = por %p84, %p85
    %p87 = scmp.ne.s32.totalorder %s78, %s79
    %p88 = scmp.eq.s32.totalorder %s14, 0
    %p89 = por %p87, %p88
    %p90 = scmp.ne.s32.totalorder %s78, %s79
    %p91 = scmp.eq.s32.totalorder %s15, 1
    %p92 = por %p90, %p91
    %p94 = scmp.ne.s32.totalorder %s79, %s93
    %p95 = scmp.eq.s32.totalorder %s15, 0
    %p96 = por %p94, %p95
    %s97 = ssub.s32 %s16, %s28
    %s98 = ssub.s32 %s17, %s24
    %s99 = sor.u32 %s97, %s98
    %p100 = scmp.eq.s32.totalorder %s99, 0
    %s102 = sadd.s32 %s101, 1
    %s103 = scalar_select %p100, %s101, %s102
    %p106 = pneg %p100
    %p107 = scmp.eq.s32.totalorder %s9, 1
    %p108 = por %p106, %p107
    %p109 = scmp.ne.s32.totalorder %s101, %s104
    %p110 = scmp.eq.s32.totalorder %s9, 0
    %p111 = por %p109, %p110
    %p112 = scmp.ne.s32.totalorder %s101, %s104
    %p113 = scmp.eq.s32.totalorder %s14, 1
    %p114 = por %p112, %p113
    %p115 = scmp.ne.s32.totalorder %s104, %s105
    %p116 = scmp.eq.s32.totalorder %s14, 0
    %p117 = por %p115, %p116
    %p118 = scmp.ne.s32.totalorder %s104, %s105
    %p119 = scmp.eq.s32.totalorder %s15, 1
    %p120 = por %p118, %p119
    %p122 = scmp.ne.s32.totalorder %s105, %s121
    %p123 = scmp.eq.s32.totalorder %s15, 0
    %p124 = por %p122, %p123
    %p125 = scmp.le.s32.totalorder 1, %s9
    %p126 = scmp.lt.s32.totalorder %s9, 3
    %p127 = pnand %p125, %p126
    %p128 = pneg %p127
    // Predicated region
    $region9: #{patch_embed_forward.2} parent=5 // pred_check
      _
    $region10: #{patch_embed_forward.2} parent=5 // pred_check_branch
      %130 = sbr.rel (%p127) target = $region12
    $region11: #{patch_embed_forward.2} parent=5 // pred_region
      %s131 = ssub.s32 %s9, 1
      // Predicated region
      $region13: #{patch_embed_forward.2} parent=11 // pred_check
        %p132 = pneg %p68
      $region14: #{patch_embed_forward.2} parent=11 // pred_check_branch
        %134 = sbr.rel (%p132) target = $region16
      $region15: #{patch_embed_forward.2} parent=11 // pred_region
        _
      $region16: #{patch_embed_forward.2} parent=11 // pred_fallthru
        _
      // Predicated region
      $region17: #{patch_embed_forward.2} parent=11 // pred_check
        %p135 = pneg %p89
      $region18: #{patch_embed_forward.2} parent=11 // pred_check_branch
        %137 = sbr.rel (%p135) target = $region20
      $region19: #{patch_embed_forward.2} parent=11 // pred_region
        _
      $region20: #{patch_embed_forward.2} parent=11 // pred_fallthru
        _
    $region12: #{patch_embed_forward.2} parent=5 // pred_fallthru
      _
    %p138 = scmp.lt.s32.totalorder %s9, 2
    // Predicated region
    $region21: #{patch_embed_forward.2} parent=5 // pred_check
      %p139 = pneg %p138
    $region22: #{patch_embed_forward.2} parent=5 // pred_check_branch
      %141 = sbr.rel (%p139) target = $region24
    $region23: #{patch_embed_forward.2} parent=5 // pred_region
      // Predicated region
      $region25: #{patch_embed_forward.2} parent=23 // pred_check
        %p142 = pneg %p41
      $region26: #{patch_embed_forward.2} parent=23 // pred_check_branch
        %144 = sbr.rel (%p142) target = $region28
      $region27: #{patch_embed_forward.2} parent=23 // pred_region
        %p145 = scmp.lt.s32.totalorder %s16, 1
        %s146 = scalar_select %p145, %s16, 1
        %s147 = smul.addr %s146, 18
        %s148 = smul.addr %s147, 4
        %s149 = scalar_lea.vmem %s0, %s148
      $region28: #{patch_embed_forward.2} parent=23 // pred_fallthru
        _
    $region24: #{patch_embed_forward.2} parent=5 // pred_fallthru
      _
    %p150 = scmp.le.s32.totalorder 1, %s9
    %p151 = scmp.lt.s32.totalorder %s9, 3
    %p152 = pnand %p150, %p151
    %p153 = pneg %p152
    // Predicated region
    $region29: #{patch_embed_forward.2} parent=5 // pred_check
      _
    $region30: #{patch_embed_forward.2} parent=5 // pred_check_branch
      %155 = sbr.rel (%p152) target = $region32
    $region31: #{patch_embed_forward.2} parent=5 // pred_region
      %s156 = ssub.s32 %s9, 1
      %p157 = scmp.lt.s32.totalorder %s18, 1
      %s158 = scalar_select %p157, %s18, 1
      %s159 = smul.addr %s158, 18
      %s160 = smul.addr %s159, 4
      %s161 = scalar_lea.vmem %s0, %s160
      %p162 = pneg %p47
      %p163 = pneg %p44
      %p164 = pneg %p68
      %p165 = pneg %p65
      %p166 = pneg %p89
      %p167 = pneg %p86
      %p168 = pneg %p117
      %p169 = pneg %p114
      %s170 = smul.u32 8, %s19
      %p171 = scmp.lt.s32.totalorder %s18, 1
      %s172 = scalar_select %p171, %s18, 1
      %p173 = scmp.lt.s32.totalorder %s170, 7
      %s174 = scalar_select %p173, %s170, 7
      %s175 = smul.addr %s172, 8
      %s176 = sadd.s32 %s174, %s175
      %s177 = smul.addr %s176, 8
      %s178 = scalar_lea.vmem %s3, %s177
      %p179 = scmp.lt.s32.totalorder %s18, 1
      %s180 = scalar_select %p179, %s18, 1
      %s181 = smul.addr %s180, 18
      %s182 = smul.addr %s181, 4
      %s183 = scalar_lea.vmem %s0, %s182
      %s184 = smul.u32 8, %s19
      %p185 = scmp.lt.s32.totalorder %s18, 1
      %s186 = scalar_select %p185, %s18, 1
      %p187 = scmp.lt.s32.totalorder %s184, 7
      %s188 = scalar_select %p187, %s184, 7
      %s189 = smul.addr %s186, 8
      %s190 = sadd.s32 %s188, %s189
      %s191 = smul.addr %s190, 8
      %s192 = scalar_lea.vmem %s3, %s191
      %s193 = smul.u32 8, %s19
      %s195 = smul.u32 %s19, 8
      %s196 = smul.u32 %s195, 2
      %s197 = smul.addr %s196, 4
      %s198 = scalar_lea.vmem %s183, %s197
      %v199 = vld [vmem:[%s198] sm:$0xf]
      %v200 = vld [vmem:[%s198 + $0x8] sm:$0xf]
      %v201 = vld [vmem:[%s198 + $0x10] sm:$0xf]
      %v202 = vld [vmem:[%s198 + $0x18] sm:$0xf]
      %v203 = vld [vmem:[%s198 + $0x20] sm:$0xf]
      %v204 = vld [vmem:[%s198 + $0x28] sm:$0xf]
      %v205 = vld [vmem:[%s198 + $0x30] sm:$0xf]
      %v206 = vld [vmem:[%s198 + $0x38] sm:$0xf]
      %v207 = vld [vmem:[%s1] sm:$0xf]
      %v208 = vld [vmem:[%s1 + $0x4] sm:$0xf]
      %v209 = vld [vmem:[%s198 + $0x4] sm:$0x1]
      %v210 = vld [vmem:[%s198 + $0xc] sm:$0x1]
      %v211 = vld [vmem:[%s198 + $0x14] sm:$0x1]
      %v212 = vld [vmem:[%s198 + $0x1c] sm:$0x1]
      %v213 = vld [vmem:[%s198 + $0x24] sm:$0x1]
      %v214 = vld [vmem:[%s198 + $0x2c] sm:$0x1]
      %v215 = vld [vmem:[%s198 + $0x34] sm:$0x1]
      %v216 = vld [vmem:[%s198 + $0x3c] sm:$0x1]
      %vm217 = vsmask.f32 3328
      %vm218 = vsmask.f32 7440
      %vm219 = vmor %vm217, %vm218
      %v221 = vshrl.u32 %v199, 16
      %v223 = vrot.slane %v221, 4
      %v224 = vshll.u32 %v199, 16
      %v226 = vrot.slane %v224, 5
      %v227 = vor.u32 %v223, %v226
      %v228 = vrot.slane %v227, 4
      %v230 = vshll.u32 %v209, 16
      %v232 = vrot.slane %v230, 5
      %v233 = vsel %vm219, %v228, %v232
      %v235 = vshrl.u32 %v200, 16
      %v237 = vrot.slane %v235, 4
      %v238 = vshll.u32 %v200, 16
      %v240 = vrot.slane %v238, 5
      %v241 = vor.u32 %v237, %v240
      %v242 = vrot.slane %v241, 4
      %v244 = vshll.u32 %v210, 16
      %v246 = vrot.slane %v244, 5
      %v247 = vsel %vm219, %v242, %v246
      %v249 = vshrl.u32 %v201, 16
      %v251 = vrot.slane %v249, 4
      %v252 = vshll.u32 %v201, 16
      %v254 = vrot.slane %v252, 5
      %v255 = vor.u32 %v251, %v254
      %v256 = vrot.slane %v255, 4
      %v258 = vshll.u32 %v211, 16
      %v260 = vrot.slane %v258, 5
      %v261 = vsel %vm219, %v256, %v260
      %v263 = vshrl.u32 %v202, 16
      %v265 = vrot.slane %v263, 4
      %v266 = vshll.u32 %v202, 16
      %v268 = vrot.slane %v266, 5
      %v269 = vor.u32 %v265, %v268
      %v270 = vrot.slane %v269, 4
      %v272 = vshll.u32 %v212, 16
      %v274 = vrot.slane %v272, 5
      %v275 = vsel %vm219, %v270, %v274
      %v277 = vshrl.u32 %v203, 16
      %v279 = vrot.slane %v277, 4
      %v280 = vshll.u32 %v203, 16
      %v282 = vrot.slane %v280, 5
      %v283 = vor.u32 %v279, %v282
      %v284 = vrot.slane %v283, 4
      %v286 = vshll.u32 %v213, 16
      %v288 = vrot.slane %v286, 5
      %v289 = vsel %vm219, %v284, %v288
      %v291 = vshrl.u32 %v204, 16
      %v293 = vrot.slane %v291, 4
      %v294 = vshll.u32 %v204, 16
      %v296 = vrot.slane %v294, 5
      %v297 = vor.u32 %v293, %v296
      %v298 = vrot.slane %v297, 4
      %v300 = vshll.u32 %v214, 16
      %v302 = vrot.slane %v300, 5
      %v303 = vsel %vm219, %v298, %v302
      %v305 = vshrl.u32 %v205, 16
      %v307 = vrot.slane %v305, 4
      %v308 = vshll.u32 %v205, 16
      %v310 = vrot.slane %v308, 5
      %v311 = vor.u32 %v307, %v310
      %v312 = vrot.slane %v311, 4
      %v314 = vshll.u32 %v215, 16
      %v316 = vrot.slane %v314, 5
      %v317 = vsel %vm219, %v312, %v316
      %v319 = vshrl.u32 %v206, 16
      %v321 = vrot.slane %v319, 4
      %v322 = vshll.u32 %v206, 16
      %v324 = vrot.slane %v322, 5
      %v325 = vor.u32 %v321, %v324
      %v326 = vrot.slane %v325, 4
      %v328 = vshll.u32 %v216, 16
      %v330 = vrot.slane %v328, 5
      %v331 = vsel %vm219, %v326, %v330
      %s332 = scalar_lea.vmem %s1, 8
      %v333 = vld [vmem:[%s332] sm:$0xf]
      %v334 = vld [vmem:[%s332 + $0x4] sm:$0xf]
      %v335 = vunpack.c.l.b16 %v233
      %v336 = vunpack.c.l.b16 %v247
      %v337 = vunpack.c.l.b16 %v261
      %v338 = vunpack.c.l.b16 %v275
      %v339 = vunpack.c.l.b16 %v289
      %v340 = vunpack.c.l.b16 %v303
      %v341 = vunpack.c.l.b16 %v317
      %v342 = vunpack.c.l.b16 %v331
      %v343 = vpack.c.b16 %v336, %v335
      %v344 = vpack.c.b16 %v338, %v337
      %v345 = vpack.c.b16 %v340, %v339
      %v346 = vpack.c.b16 %v342, %v341
      %v349 = vunpack.c.l.b16 %v333
      %v350 = vunpack.c.l.b16 %v334
      %v351 = vpack.c.b16 %v350, %v349
      %vm353 = vcmask 130048
      %v355 = vsel %vm353, %v343, 0
      %v358 = vsel %vm353, %v344, 0
      %v361 = vsel %vm353, %v345, 0
      %v364 = vsel %vm353, %v346, 0
      %366 = vmatprep.subr.bf16.mxu0 0
      %367 = vmatpush1.bf16.msra.mxu0 %v351
      %368 = vmatprep.subr.bf16.mxu0 0
      %369 = vmatpush1.bf16.msra.mxu0 0
      %370 = vmatprep.subr.bf16.mxu0 0
      %371 = vmatpush1.bf16.msra.mxu0 0
      %372 = vmatprep.subr.bf16.mxu0 0
      %373 = vmatpush1.bf16.msra.mxu0 0
      %374 = vmatprep.subr.bf16.mxu0 0
      %375 = vmatpush1.bf16.msra.mxu0 0
      %376 = vmatprep.subr.bf16.mxu0 0
      %377 = vmatpush1.bf16.msra.mxu0 0
      %378 = vmatprep.subr.bf16.mxu0 0
      %379 = vmatpush1.bf16.msra.mxu0 0
      %380 = vmatprep.subr.bf16.mxu0 0
      %381 = vmatpush1.bf16.msra.mxu0 0
      %382 = vmatprep.subr.bf16.mxu0 0
      %383 = vmatpush1.bf16.msra.mxu0 0
      %384 = vmatprep.subr.bf16.mxu0 0
      %385 = vmatpush1.bf16.msra.mxu0 0
      %386 = vmatprep.subr.bf16.mxu0 0
      %387 = vmatpush1.bf16.msra.mxu0 0
      %388 = vmatprep.subr.bf16.mxu0 0
      %389 = vmatpush1.bf16.msra.mxu0 0
      %390 = vmatprep.subr.bf16.mxu0 0
      %391 = vmatpush1.bf16.msra.mxu0 0
      %392 = vmatprep.subr.bf16.mxu0 0
      %393 = vmatpush1.bf16.msra.mxu0 0
      %394 = vmatprep.subr.bf16.mxu0 0
      %395 = vmatpush1.bf16.msra.mxu0 0
      %396 = vmatprep.subr.bf16.mxu0 0
      %397 = vmatpush1.bf16.msra.mxu0 0
      %398 = vmatprep.mubr.bf16.mxu0 0
      %399 = vmatmul.mubr.bf16.gmra.mrb[0].mxu0 %v355
      %v400 = vpop.f32.mrb[0].mxu0
      %v401 = vadd.f32 0.0, %v400
      %v402 = vpop.f32.mrb[0].mxu0
      %v403 = vpop.f32.mrb[0].mxu0
      %v404 = vadd.f32 0.0, %v403
      %v405 = vpop.f32.mrb[0].mxu0
      %406 = vmatprep.mubr.bf16.mxu0 0
      %407 = vmatmul.mubr.bf16.gmra.mrb[0].mxu0 %v358
      %v408 = vpop.f32.mrb[0].mxu0
      %v409 = vadd.f32 0.0, %v408
      %v410 = vpop.f32.mrb[0].mxu0
      %v411 = vpop.f32.mrb[0].mxu0
      %v412 = vadd.f32 0.0, %v411
      %v413 = vpop.f32.mrb[0].mxu0
      %414 = vmatprep.mubr.bf16.mxu0 0
      %415 = vmatmul.mubr.bf16.gmra.mrb[0].mxu0 %v361
      %v416 = vpop.f32.mrb[0].mxu0
      %v417 = vadd.f32 0.0, %v416
      %v418 = vpop.f32.mrb[0].mxu0
      %v419 = vpop.f32.mrb[0].mxu0
      %v420 = vadd.f32 0.0, %v419
      %v421 = vpop.f32.mrb[0].mxu0
      %422 = vmatprep.mubr.bf16.mxu0 0
      %423 = vmatmul.mubr.bf16.gmra.mrb[0].mxu0 %v364
      %v424 = vpop.f32.mrb[0].mxu0
      %v425 = vadd.f32 0.0, %v424
      %v426 = vpop.f32.mrb[0].mxu0
      %v427 = vpop.f32.mrb[0].mxu0
      %v428 = vadd.f32 0.0, %v427
      %v429 = vpop.f32.mrb[0].mxu0
      %430 = vdwg.mxu0
      %v439 = vunpack.c.l.b16 %v199
      %v440 = vunpack.c.l.b16 %v200
      %v441 = vunpack.c.l.b16 %v201
      %v442 = vunpack.c.l.b16 %v202
      %v443 = vunpack.c.l.b16 %v203
      %v444 = vunpack.c.l.b16 %v204
      %v445 = vunpack.c.l.b16 %v205
      %v446 = vunpack.c.l.b16 %v206
      %v447 = vpack.c.b16 %v440, %v439
      %v448 = vpack.c.b16 %v442, %v441
      %v449 = vpack.c.b16 %v444, %v443
      %v450 = vpack.c.b16 %v446, %v445
      %v453 = vunpack.c.l.b16 %v207
      %v454 = vunpack.c.l.b16 %v208
      %v455 = vpack.c.b16 %v454, %v453
      %v458 = vsel %vm353, %v447, 0
      %v461 = vsel %vm353, %v448, 0
      %v464 = vsel %vm353, %v449, 0
      %v467 = vsel %vm353, %v450, 0
      %469 = vmatprep.subr.bf16.mxu0 0
      %470 = vmatpush1.bf16.msra.mxu0 %v455
      %471 = vmatprep.subr.bf16.mxu0 0
      %472 = vmatpush1.bf16.msra.mxu0 0
      %473 = vmatprep.subr.bf16.mxu0 0
      %474 = vmatpush1.bf16.msra.mxu0 0
      %475 = vmatprep.subr.bf16.mxu0 0
      %476 = vmatpush1.bf16.msra.mxu0 0
      %477 = vmatprep.subr.bf16.mxu0 0
      %478 = vmatpush1.bf16.msra.mxu0 0
      %479 = vmatprep.subr.bf16.mxu0 0
      %480 = vmatpush1.bf16.msra.mxu0 0
      %481 = vmatprep.subr.bf16.mxu0 0
      %482 = vmatpush1.bf16.msra.mxu0 0
      %483 = vmatprep.subr.bf16.mxu0 0
      %484 = vmatpush1.bf16.msra.mxu0 0
      %485 = vmatprep.subr.bf16.mxu0 0
      %486 = vmatpush1.bf16.msra.mxu0 0
      %487 = vmatprep.subr.bf16.mxu0 0
      %488 = vmatpush1.bf16.msra.mxu0 0
      %489 = vmatprep.subr.bf16.mxu0 0
      %490 = vmatpush1.bf16.msra.mxu0 0
      %491 = vmatprep.subr.bf16.mxu0 0
      %492 = vmatpush1.bf16.msra.mxu0 0
      %493 = vmatprep.subr.bf16.mxu0 0
      %494 = vmatpush1.bf16.msra.mxu0 0
      %495 = vmatprep.subr.bf16.mxu0 0
      %496 = vmatpush1.bf16.msra.mxu0 0
      %497 = vmatprep.subr.bf16.mxu0 0
      %498 = vmatpush1.bf16.msra.mxu0 0
      %499 = vmatprep.subr.bf16.mxu0 0
      %500 = vmatpush1.bf16.msra.mxu0 0
      %501 = vmatprep.mubr.bf16.mxu0 0
      %502 = vmatmul.mubr.bf16.gmra.mrb[0].mxu0 %v458
      %v503 = vpop.f32.mrb[0].mxu0
      %v504 = vadd.f32 %v401, %v503
      %v505 = vpop.f32.mrb[0].mxu0
      %v506 = vpop.f32.mrb[0].mxu0
      %v507 = vadd.f32 %v404, %v506
      %v508 = vpop.f32.mrb[0].mxu0
      %509 = vmatprep.mubr.bf16.mxu0 0
      %510 = vmatmul.mubr.bf16.gmra.mrb[0].mxu0 %v461
      %v511 = vpop.f32.mrb[0].mxu0
      %v512 = vadd.f32 %v409, %v511
      %v513 = vpop.f32.mrb[0].mxu0
      %v514 = vpop.f32.mrb[0].mxu0
      %v515 = vadd.f32 %v412, %v514
      %v516 = vpop.f32.mrb[0].mxu0
      %517 = vmatprep.mubr.bf16.mxu0 0
      %518 = vmatmul.mubr.bf16.gmra.mrb[0].mxu0 %v464
      %v519 = vpop.f32.mrb[0].mxu0
      %v520 = vadd.f32 %v417, %v519
      %v521 = vpop.f32.mrb[0].mxu0
      %v522 = vpop.f32.mrb[0].mxu0
      %v523 = vadd.f32 %v420, %v522
      %v524 = vpop.f32.mrb[0].mxu0
      %525 = vmatprep.mubr.bf16.mxu0 0
      %526 = vmatmul.mubr.bf16.gmra.mrb[0].mxu0 %v467
      %v527 = vpop.f32.mrb[0].mxu0
      %v528 = vadd.f32 %v425, %v527
      %v529 = vpop.f32.mrb[0].mxu0
      %v530 = vpop.f32.mrb[0].mxu0
      %v531 = vadd.f32 %v428, %v530
      %v532 = vpop.f32.mrb[0].mxu0
      %533 = vdwg.mxu0
      %s534 = sadd.s32 %s195, 1
      %s535 = smul.u32 %s534, 2
      %s536 = smul.addr %s535, 4
      %s537 = scalar_lea.vmem %s183, %s536
      %v538 = vld [vmem:[%s537] sm:$0xf]
      %v539 = vld [vmem:[%s537 + $0x8] sm:$0xf]
      %v540 = vld [vmem:[%s537 + $0x10] sm:$0xf]
      %v541 = vld [vmem:[%s537 + $0x18] sm:$0xf]
      %v542 = vld [vmem:[%s537 + $0x20] sm:$0xf]
      %v543 = vld [vmem:[%s537 + $0x28] sm:$0xf]
      %v544 = vld [vmem:[%s537 + $0x30] sm:$0xf]
      %v545 = vld [vmem:[%s537 + $0x38] sm:$0xf]
      %s546 = scalar_lea.vmem %s1, 16
      %v547 = vld [vmem:[%s546] sm:$0xf]
      %v548 = vld [vmem:[%s546 + $0x4] sm:$0xf]
      %v557 = vunpack.c.l.b16 %v538
      %v558 = vunpack.c.l.b16 %v539
      %v559 = vunpack.c.l.b16 %v540
      %v560 = vunpack.c.l.b16 %v541
      %v561 = vunpack.c.l.b16 %v542
      %v562 = vunpack.c.l.b16 %v543
      %v563 = vunpack.c.l.b16 %v544
      %v564 = vunpack.c.l.b16 %v545
      %v565 = vpack.c.b16 %v558, %v557
      %v566 = vpack.c.b16 %v560, %v559
      %v567 = vpack.c.b16 %v562, %v561
      %v568 = vpack.c.b16 %v564, %v563
      %v571 = vunpack.c.l.b16 %v547
      %v572 = vunpack.c.l.b16 %v548
      %v573 = vpack.c.b16 %v572, %v571
      %v576 = vsel %vm353, %v565, 0
      %v579 = vsel %vm353, %v566, 0
      %v582 = vsel %vm353, %v567, 0
      %v585 = vsel %vm353, %v568, 0
      %587 = vmatprep.subr.bf16.mxu0 0
      %588 = vmatpush1.bf16.msra.mxu0 %v573
      %589 = vmatprep.subr.bf16.mxu0 0
      %590 = vmatpush1.bf16.msra.mxu0 0
      %591 = vmatprep.subr.bf16.mxu0 0
      %592 = vmatpush1.bf16.msra.mxu0 0
      %593 = vmatprep.subr.bf16.mxu0 0
      %594 = vmatpush1.bf16.msra.mxu0 0
      %595 = vmatprep.subr.bf16.mxu0 0
      %596 = vmatpush1.bf16.msra.mxu0 0
      %597 = vmatprep.subr.bf16.mxu0 0
      %598 = vmatpush1.bf16.msra.mxu0 0
      %599 = vmatprep.subr.bf16.mxu0 0
      %600 = vmatpush1.bf16.msra.mxu0 0
      %601 = vmatprep.subr.bf16.mxu0 0
      %602 = vmatpush1.bf16.msra.mxu0 0
      %603 = vmatprep.subr.bf16.mxu0 0
      %604 = vmatpush1.bf16.msra.mxu0 0
      %605 = vmatprep.subr.bf16.mxu0 0
      %606 = vmatpush1.bf16.msra.mxu0 0
      %607 = vmatprep.subr.bf16.mxu0 0
      %608 = vmatpush1.bf16.msra.mxu0 0
      %609 = vmatprep.subr.bf16.mxu0 0
      %610 = vmatpush1.bf16.msra.mxu0 0
      %611 = vmatprep.subr.bf16.mxu0 0
      %612 = vmatpush1.bf16.msra.mxu0 0
      %613 = vmatprep.subr.bf16.mxu0 0
      %614 = vmatpush1.bf16.msra.mxu0 0
      %615 = vmatprep.subr.bf16.mxu0 0
      %616 = vmatpush1.bf16.msra.mxu0 0
      %617 = vmatprep.subr.bf16.mxu0 0
      %618 = vmatpush1.bf16.msra.mxu0 0
      %619 = vmatprep.mubr.bf16.mxu0 0
      %620 = vmatmul.mubr.bf16.gmra.mrb[0].mxu0 %v576
      %v621 = vpop.f32.mrb[0].mxu0
      %v622 = vadd.f32 0.0, %v621
      %v623 = vpop.f32.mrb[0].mxu0
      %v624 = vpop.f32.mrb[0].mxu0
      %v625 = vadd.f32 0.0, %v624
      %v626 = vpop.f32.mrb[0].mxu0
      %627 = vmatprep.mubr.bf16.mxu0 0
      %628 = vmatmul.mubr.bf16.gmra.mrb[0].mxu0 %v579
      %v629 = vpop.f32.mrb[0].mxu0
      %v630 = vadd.f32 0.0, %v629
      %v631 = vpop.f32.mrb[0].mxu0
      %v632 = vpop.f32.mrb[0].mxu0
      %v633 = vadd.f32 0.0, %v632
      %v634 = vpop.f32.mrb[0].mxu0
      %635 = vmatprep.mubr.bf16.mxu0 0
      %636 = vmatmul.mubr.bf16.gmra.mrb[0].mxu0 %v582
      %v637 = vpop.f32.mrb[0].mxu0
      %v638 = vadd.f32 0.0, %v637
      %v639 = vpop.f32.mrb[0].mxu0
      %v640 = vpop.f32.mrb[0].mxu0
      %v641 = vadd.f32 0.0, %v640
      %v642 = vpop.f32.mrb[0].mxu0
      %643 = vmatprep.mubr.bf16.mxu0 0
      %644 = vmatmul.mubr.bf16.gmra.mrb[0].mxu0 %v585
      %v645 = vpop.f32.mrb[0].mxu0
      %v646 = vadd.f32 0.0, %v645
      %v647 = vpop.f32.mrb[0].mxu0
      %v648 = vpop.f32.mrb[0].mxu0
      %v649 = vadd.f32 0.0, %v648
      %v650 = vpop.f32.mrb[0].mxu0
      %651 = vdwg.mxu0
      %v652 = vadd.f32 %v504, %v622
      %v653 = vadd.f32 %v507, %v625
      %v654 = vadd.f32 %v512, %v630
      %v655 = vadd.f32 %v515, %v633
      %v656 = vadd.f32 %v520, %v638
      %v657 = vadd.f32 %v523, %v641
      %v658 = vadd.f32 %v528, %v646
      %v659 = vadd.f32 %v531, %v649
      %v660 = vld [vmem:[%s537] sm:$0xf]
      %v661 = vld [vmem:[%s537 + $0x4] sm:$0x1]
      %v662 = vld [vmem:[%s537 + $0x8] sm:$0xf]
      %v663 = vld [vmem:[%s537 + $0xc] sm:$0x1]
      %v664 = vld [vmem:[%s537 + $0x10] sm:$0xf]
      %v665 = vld [vmem:[%s537 + $0x14] sm:$0x1]
      %v666 = vld [vmem:[%s537 + $0x18] sm:$0xf]
      %v667 = vld [vmem:[%s537 + $0x1c] sm:$0x1]
      %v668 = vld [vmem:[%s537 + $0x20] sm:$0xf]
      %v669 = vld [vmem:[%s537 + $0x24] sm:$0x1]
      %v670 = vld [vmem:[%s537 + $0x28] sm:$0xf]
      %v671 = vld [vmem:[%s537 + $0x2c] sm:$0x1]
      %v672 = vld [vmem:[%s537 + $0x30] sm:$0xf]
      %v673 = vld [vmem:[%s537 + $0x34] sm:$0x1]
      %v674 = vld [vmem:[%s537 + $0x38] sm:$0xf]
      %v675 = vld [vmem:[%s537 + $0x3c] sm:$0x1]
      %v677 = vshrl.u32 %v660, 16
      %v679 = vrot.slane %v677, 4
      %v680 = vshll.u32 %v660, 16
      %v682 = vrot.slane %v680, 5
      %v683 = vor.u32 %v679, %v682
      %v684 = vrot.slane %v683, 4
      %v686 = vshll.u32 %v661, 16
      %v688 = vrot.slane %v686, 5
      %v689 = vsel %vm219, %v684, %v688
      %v691 = vshrl.u32 %v662, 16
      %v693 = vrot.slane %v691, 4
      %v694 = vshll.u32 %v662, 16
      %v696 = vrot.slane %v694, 5
      %v697 = vor.u32 %v693, %v696
      %v698 = vrot.slane %v697, 4
      %v700 = vshll.u32 %v663, 16
      %v702 = vrot.slane %v700, 5
      %v703 = vsel %vm219, %v698, %v702
      %v705 = vshrl.u32 %v664, 16
      %v707 = vrot.slane %v705, 4
      %v708 = vshll.u32 %v664, 16
      %v710 = vrot.slane %v708, 5
      %v711 = vor.u32 %v707, %v710
      %v712 = vrot.slane %v711, 4
      %v714 = vshll.u32 %v665, 16
      %v716 = vrot.slane %v714, 5
      %v717 = vsel %vm219, %v712, %v716
      %v719 = vshrl.u32 %v666, 16
      %v721 = vrot.slane %v719, 4
      %v722 = vshll.u32 %v666, 16
      %v724 = vrot.slane %v722, 5
      %v725 = vor.u32 %v721, %v724
      %v726 = vrot.slane %v725, 4
      %v728 = vshll.u32 %v667, 16
      %v730 = vrot.slane %v728, 5
      %v731 = vsel %vm219, %v726, %v730
      %v733 = vshrl.u32 %v668, 16
      %v735 = vrot.slane %v733, 4
      %v736 = vshll.u32 %v668, 16
      %v738 = vrot.slane %v736, 5
      %v739 = vor.u32 %v735, %v738
      %v740 = vrot.slane %v739, 4
      %v742 = vshll.u32 %v669, 16
      %v744 = vrot.slane %v742, 5
      %v745 = vsel %vm219, %v740, %v744
      %v747 = vshrl.u32 %v670, 16
      %v749 = vrot.slane %v747, 4
      %v750 = vshll.u32 %v670, 16
      %v752 = vrot.slane %v750, 5
      %v753 = vor.u32 %v749, %v752
      %v754 = vrot.slane %v753, 4
      %v756 = vshll.u32 %v671, 16
      %v758 = vrot.slane %v756, 5
      %v759 = vsel %vm219, %v754, %v758
      %v761 = vshrl.u32 %v672, 16
      %v763 = vrot.slane %v761, 4
      %v764 = vshll.u32 %v672, 16
      %v766 = vrot.slane %v764, 5
      %v767 = vor.u32 %v763, %v766
      %v768 = vrot.slane %v767, 4
      %v770 = vshll.u32 %v673, 16
      %v772 = vrot.slane %v770, 5
      %v773 = vsel %vm219, %v768, %v772
      %v775 = vshrl.u32 %v674, 16
      %v777 = vrot.slane %v775, 4
      %v778 = vshll.u32 %v674, 16
      %v780 = vrot.slane %v778, 5
      %v781 = vor.u32 %v777, %v780
      %v782 = vrot.slane %v781, 4
      %v784 = vshll.u32 %v675, 16
      %v786 = vrot.slane %v784, 5
      %v787 = vsel %vm219, %v782, %v786
      %s788 = scalar_lea.vmem %s1, 24
      %v789 = vld [vmem:[%s788] sm:$0xf]
      %v790 = vld [vmem:[%s788 + $0x4] sm:$0xf]
      %v791 = vunpack.c.l.b16 %v689
      %v792 = vunpack.c.l.b16 %v703
      %v793 = vunpack.c.l.b16 %v717
      %v794 = vunpack.c.l.b16 %v731
      %v795 = vunpack.c.l.b16 %v745
      %v796 = vunpack.c.l.b16 %v759
      %v797 = vunpack.c.l.b16 %v773
      %v798 = vunpack.c.l.b16 %v787
      %v799 = vpack.c.b16 %v792, %v791
      %v800 = vpack.c.b16 %v794, %v793
      %v801 = vpack.c.b16 %v796, %v795
      %v802 = vpack.c.b16 %v798, %v797
      %v805 = vunpack.c.l.b16 %v789
      %v806 = vunpack.c.l.b16 %v790
      %v807 = vpack.c.b16 %v806, %v805
      %v810 = vsel %vm353, %v799, 0
      %v813 = vsel %vm353, %v800, 0
      %v816 = vsel %vm353, %v801, 0
      %v819 = vsel %vm353, %v802, 0
      %821 = vmatprep.subr.bf16.mxu0 0
      %822 = vmatpush1.bf16.msra.mxu0 %v807
      %823 = vmatprep.subr.bf16.mxu0 0
      %824 = vmatpush1.bf16.msra.mxu0 0
      %825 = vmatprep.subr.bf16.mxu0 0
      %826 = vmatpush1.bf16.msra.mxu0 0
      %827 = vmatprep.subr.bf16.mxu0 0
      %828 = vmatpush1.bf16.msra.mxu0 0
      %829 = vmatprep.subr.bf16.mxu0 0
      %830 = vmatpush1.bf16.msra.mxu0 0
      %831 = vmatprep.subr.bf16.mxu0 0
      %832 = vmatpush1.bf16.msra.mxu0 0
      %833 = vmatprep.subr.bf16.mxu0 0
      %834 = vmatpush1.bf16.msra.mxu0 0
      %835 = vmatprep.subr.bf16.mxu0 0
      %836 = vmatpush1.bf16.msra.mxu0 0
      %837 = vmatprep.subr.bf16.mxu0 0
      %838 = vmatpush1.bf16.msra.mxu0 0
      %839 = vmatprep.subr.bf16.mxu0 0
      %840 = vmatpush1.bf16.msra.mxu0 0
      %841 = vmatprep.subr.bf16.mxu0 0
      %842 = vmatpush1.bf16.msra.mxu0 0
      %843 = vmatprep.subr.bf16.mxu0 0
      %844 = vmatpush1.bf16.msra.mxu0 0
      %845 = vmatprep.subr.bf16.mxu0 0
      %846 = vmatpush1.bf16.msra.mxu0 0
      %847 = vmatprep.subr.bf16.mxu0 0
      %848 = vmatpush1.bf16.msra.mxu0 0
      %849 = vmatprep.subr.bf16.mxu0 0
      %850 = vmatpush1.bf16.msra.mxu0 0
      %851 = vmatprep.subr.bf16.mxu0 0
      %852 = vmatpush1.bf16.msra.mxu0 0
      %853 = vmatprep.mubr.bf16.mxu0 0
      %854 = vmatmul.mubr.bf16.gmra.mrb[0].mxu0 %v810
      %v855 = vpop.f32.mrb[0].mxu0
      %v856 = vadd.f32 0.0, %v855
      %v857 = vpop.f32.mrb[0].mxu0
      %v858 = vpop.f32.mrb[0].mxu0
      %v859 = vadd.f32 0.0, %v858
      %v860 = vpop.f32.mrb[0].mxu0
      %861 = vmatprep.mubr.bf16.mxu0 0
      %862 = vmatmul.mubr.bf16.gmra.mrb[0].mxu0 %v813
      %v863 = vpop.f32.mrb[0].mxu0
      %v864 = vadd.f32 0.0, %v863
      %v865 = vpop.f32.mrb[0].mxu0
      %v866 = vpop.f32.mrb[0].mxu0
      %v867 = vadd.f32 0.0, %v866
      %v868 = vpop.f32.mrb[0].mxu0
      %869 = vmatprep.mubr.bf16.mxu0 0
      %870 = vmatmul.mubr.bf16.gmra.mrb[0].mxu0 %v816
      %v871 = vpop.f32.mrb[0].mxu0
      %v872 = vadd.f32 0.0, %v871
      %v873 = vpop.f32.mrb[0].mxu0
      %v874 = vpop.f32.mrb[0].mxu0
      %v875 = vadd.f32 0.0, %v874
      %v876 = vpop.f32.mrb[0].mxu0
      %877 = vmatprep.mubr.bf16.mxu0 0
      %878 = vmatmul.mubr.bf16.gmra.mrb[0].mxu0 %v819
      %v879 = vpop.f32.mrb[0].mxu0
      %v880 = vadd.f32 0.0, %v879
      %v881 = vpop.f32.mrb[0].mxu0
      %v882 = vpop.f32.mrb[0].mxu0
      %v883 = vadd.f32 0.0, %v882
      %v884 = vpop.f32.mrb[0].mxu0
      %885 = vdwg.mxu0
      %v886 = vadd.f32 %v652, %v856
      %v887 = vadd.f32 %v653, %v859
      %v888 = vadd.f32 %v654, %v864
      %v889 = vadd.f32 %v655, %v867
      %v890 = vadd.f32 %v656, %v872
      %v891 = vadd.f32 %v657, %v875
      %v892 = vadd.f32 %v658, %v880
      %v893 = vadd.f32 %v659, %v883
      %v894 = vld [vmem:[%s2] sm:$0x1]
      %v896 = vlaneseq
      %v897 = vshrl.u32 %v896, 7
      %v898 = vsub.s32 0, %v897
      %v899 = vrot.slane %v894, %v898
      %v901 = vadd.f32 %v886, %v899
      %v902 = vadd.f32 %v887, %v899
      %v903 = vadd.f32 %v888, %v899
      %v904 = vadd.f32 %v889, %v899
      %v905 = vadd.f32 %v890, %v899
      %v906 = vadd.f32 %v891, %v899
      %v907 = vadd.f32 %v892, %v899
      %v908 = vadd.f32 %v893, %v899
      %v909 = vmax.f32 %v901, 0.0
      %v910 = vmax.f32 %v902, 0.0
      %v911 = vmax.f32 %v903, 0.0
      %v912 = vmax.f32 %v904, 0.0
      %v913 = vmax.f32 %v905, 0.0
      %v914 = vmax.f32 %v906, 0.0
      %v915 = vmax.f32 %v907, 0.0
      %v916 = vmax.f32 %v908, 0.0
      %vm917 = vcmask 261120
      %918 = vst.msk [vmem:[%s192] sm:$0xff] %vm917, %v909
      %919 = vst.msk [vmem:[%s192 + $0x8] sm:$0xff] %vm917, %v910
      %920 = vst.msk [vmem:[%s192 + $0x10] sm:$0xff] %vm917, %v911
      %921 = vst.msk [vmem:[%s192 + $0x18] sm:$0xff] %vm917, %v912
      %922 = vst.msk [vmem:[%s192 + $0x20] sm:$0xff] %vm917, %v913
      %923 = vst.msk [vmem:[%s192 + $0x28] sm:$0xff] %vm917, %v914
      %924 = vst.msk [vmem:[%s192 + $0x30] sm:$0xff] %vm917, %v915
      %925 = vst.msk [vmem:[%s192 + $0x38] sm:$0xff] %vm917, %v916
      %s926 = smul.u32 8, %s19
      %p927 = scmp.lt.s32.totalorder %s18, 1
      %s928 = scalar_select %p927, %s18, 1
      %p929 = scmp.lt.s32.totalorder %s926, 7
      %s930 = scalar_select %p929, %s926, 7
      %s931 = smul.addr %s928, 8
      %s932 = sadd.s32 %s930, %s931
      %s933 = smul.addr %s932, 8
      %s934 = scalar_lea.vmem %s3, %s933
      // Predicated region
      $region33: #{patch_embed_forward.2} parent=31 // pred_check
        %p935 = pneg %p114
      $region34: #{patch_embed_forward.2} parent=31 // pred_check_branch
        %937 = sbr.rel (%p935) target = $region36
      $region35: #{patch_embed_forward.2} parent=31 // pred_region
        %s938 = smul.u32 8, %s19
      $region36: #{patch_embed_forward.2} parent=31 // pred_fallthru
        _
    $region32: #{patch_embed_forward.2} parent=5 // pred_fallthru
      _
    %p939 = scmp.le.s32.totalorder 2, %s9
    // Predicated region
    $region37: #{patch_embed_forward.2} parent=5 // pred_check
      %p940 = pneg %p939
    $region38: #{patch_embed_forward.2} parent=5 // pred_check_branch
      %942 = sbr.rel (%p940) target = $region40
    $region39: #{patch_embed_forward.2} parent=5 // pred_region
      %s943 = ssub.s32 %s9, 2
      // Predicated region
      $region41: #{patch_embed_forward.2} parent=39 // pred_check
        %p944 = pneg %p120
      $region42: #{patch_embed_forward.2} parent=39 // pred_check_branch
        %946 = sbr.rel (%p944) target = $region44
      $region43: #{patch_embed_forward.2} parent=39 // pred_region
        %s947 = smul.u32 8, %s21
        %p948 = scmp.lt.s32.totalorder %s20, 1
        %s949 = scalar_select %p948, %s20, 1
        %p950 = scmp.lt.s32.totalorder %s947, 7
        %s951 = scalar_select %p950, %s947, 7
        %s952 = smul.addr %s949, 8
        %s953 = sadd.s32 %s951, %s952
        %s954 = smul.addr %s953, 8
        %s955 = scalar_lea.vmem %s3, %s954
      $region44: #{patch_embed_forward.2} parent=39 // pred_fallthru
        _
    $region40: #{patch_embed_forward.2} parent=5 // pred_fallthru
      _
  $region6: #{patch_embed_forward.2} parent=0 // loop_footer
    %s13 = sadd.s32 1, %s9
  $region7: #{patch_embed_forward.2} parent=0 // loop_footer_branch
    %8 = sbr.rel target = $region3
  $region8: #{patch_embed_forward.2} parent=0 // loop_exit
    _

// kernel: patch_embed_forward.3
$region0: #{patch_embed_forward.3}
  #allocation0 [shape = 'u32[]', space=smem, size = 0x4, offset = 0x4, fixed_abs, tag = 'smem constant byte address 0x4 - core index']
  #allocation1 [shape = 'u32[144,128]{1,0:T(1,128)}', space=vmem, size = 0x12000, scoped, tag = 'internal scratch']
  %s0 = inlined_call_operand.vmem [shape: bf16[2,5,9,128], index: 0, kind: input, shape index: {}]
  %s1 = inlined_call_operand.vmem [shape: bf16[4,128,32], index: 1, kind: input, shape index: {}]
  %s2 = inlined_call_operand.vmem [shape: f32[1,32], index: 2, kind: input, shape index: {}]
  %s3 = inlined_call_operand.vmem [shape: f32[2,32,32], index: 3, kind: output, shape index: {}]
  %s4 = sld [smem:[#allocation0]]
  $region45: #{patch_embed_forward.3} parent=0
    _
  %s6 = ssub.s32 1, %s4
  %s7 = scalar_select 0, %s6, %s4
  loop: start=0, step=1, limit=4
  $region2: #{patch_embed_forward.3} parent=0 // loop_pre_header
    _
  $region3: #{patch_embed_forward.3} parent=0 // loop_header
    %s9 = sphi 0, %s13
    %p10 = scmp.ge.s32.totalorder %s9, 4
    %s16 = sphi 0, %s28
    %s17 = sphi 0, %s24
    %s18 = sphi 0, %s16
    %s19 = sphi 0, %s17
    %s20 = sphi 0, %s18
    %s21 = sphi 0, %s19
    %s31 = sphi 0, %s33
    %s34 = sphi 0, %s31
    %s35 = sphi 0, %s34
    %s51 = sphi 0, %s35
    %s55 = sphi 0, %s55
    %s57 = sphi 0, %s55
    %s58 = sphi 0, %s57
    %s72 = sphi 0, %s58
    %s76 = sphi 0, %s76
    %s78 = sphi 0, %s76
    %s79 = sphi 0, %s78
    %s93 = sphi 0, %s79
    %s101 = sphi 0, %s103
    %s104 = sphi 0, %s101
    %s105 = sphi 0, %s104
    %s121 = sphi 0, %s105
  $region4: #{patch_embed_forward.3} parent=0 // loop_header_branch
    %12 = sbr.rel (%p10) target = $region8
  $region5: #{patch_embed_forward.3} parent=0 // loop_body
    %s14 = ssub.s32 %s9, 1
    %s15 = ssub.s32 %s9, 2
    %s22 = sadd.s32 1, %s17
    %p23 = scmp.ge.s32.totalorder %s22, 1
    %s24 = scalar_select %p23, 0, %s22
    %s25 = sadd.s32 1, %s16
    %s26 = scalar_select %p23, %s25, %s16
    %p27 = scmp.ge.s32.totalorder %s26, 2
    %s28 = scalar_select %p27, 0, %s26
    %s29 = ssub.s32 %s16, %s28
    %p30 = scmp.eq.s32.totalorder %s29, 0
    %s32 = sadd.s32 %s31, 1
    %s33 = scalar_select %p30, %s31, %s32
    %p36 = pneg %p30
    %p37 = scmp.eq.s32.totalorder %s9, 1
    %p38 = por %p36, %p37
    %p39 = scmp.ne.s32.totalorder %s31, %s34
    %p40 = scmp.eq.s32.totalorder %s9, 0
    %p41 = por %p39, %p40
    %p42 = scmp.ne.s32.totalorder %s31, %s34
    %p43 = scmp.eq.s32.totalorder %s14, 1
    %p44 = por %p42, %p43
    %p45 = scmp.ne.s32.totalorder %s34, %s35
    %p46 = scmp.eq.s32.totalorder %s14, 0
    %p47 = por %p45, %p46
    %p48 = scmp.ne.s32.totalorder %s34, %s35
    %p49 = scmp.eq.s32.totalorder %s15, 1
    %p50 = por %p48, %p49
    %p52 = scmp.ne.s32.totalorder %s35, %s51
    %p53 = scmp.eq.s32.totalorder %s15, 0
    %p54 = por %p52, %p53
    %s56 = sadd.s32 %s55, 1
    %p59 = scmp.eq.s32.totalorder %s9, 1
    %p60 = scmp.ne.s32.totalorder %s55, %s57
    %p61 = scmp.eq.s32.totalorder %s9, 0
    %p62 = por %p60, %p61
    %p63 = scmp.ne.s32.totalorder %s55, %s57
    %p64 = scmp.eq.s32.totalorder %s14, 1
    %p65 = por %p63, %p64
    %p66 = scmp.ne.s32.totalorder %s57, %s58
    %p67 = scmp.eq.s32.totalorder %s14, 0
    %p68 = por %p66, %p67
    %p69 = scmp.ne.s32.totalorder %s57, %s58
    %p70 = scmp.eq.s32.totalorder %s15, 1
    %p71 = por %p69, %p70
    %p73 = scmp.ne.s32.totalorder %s58, %s72
    %p74 = scmp.eq.s32.totalorder %s15, 0
    %p75 = por %p73, %p74
    %s77 = sadd.s32 %s76, 1
    %p80 = scmp.eq.s32.totalorder %s9, 1
    %p81 = scmp.ne.s32.totalorder %s76, %s78
    %p82 = scmp.eq.s32.totalorder %s9, 0
    %p83 = por %p81, %p82
    %p84 = scmp.ne.s32.totalorder %s76, %s78
    %p85 = scmp.eq.s32.totalorder %s14, 1
    %p86 = por %p84, %p85
    %p87 = scmp.ne.s32.totalorder %s78, %s79
    %p88 = scmp.eq.s32.totalorder %s14, 0
    %p89 = por %p87, %p88
    %p90 = scmp.ne.s32.totalorder %s78, %s79
    %p91 = scmp.eq.s32.totalorder %s15, 1
    %p92 = por %p90, %p91
    %p94 = scmp.ne.s32.totalorder %s79, %s93
    %p95 = scmp.eq.s32.totalorder %s15, 0
    %p96 = por %p94, %p95
    %s97 = ssub.s32 %s16, %s28
    %s98 = ssub.s32 %s17, %s24
    %s99 = sor.u32 %s97, %s98
    %p100 = scmp.eq.s32.totalorder %s99, 0
    %s102 = sadd.s32 %s101, 1
    %s103 = scalar_select %p100, %s101, %s102
    %p106 = pneg %p100
    %p107 = scmp.eq.s32.totalorder %s9, 1
    %p108 = por %p106, %p107
    %p109 = scmp.ne.s32.totalorder %s101, %s104
    %p110 = scmp.eq.s32.totalorder %s9, 0
    %p111 = por %p109, %p110
    %p112 = scmp.ne.s32.totalorder %s101, %s104
    %p113 = scmp.eq.s32.totalorder %s14, 1
    %p114 = por %p112, %p113
    %p115 = scmp.ne.s32.totalorder %s104, %s105
    %p116 = scmp.eq.s32.totalorder %s14, 0
    %p117 = por %p115, %p116
    %p118 = scmp.ne.s32.totalorder %s104, %s105
    %p119 = scmp.eq.s32.totalorder %s15, 1
    %p120 = por %p118, %p119
    %p122 = scmp.ne.s32.totalorder %s105, %s121
    %p123 = scmp.eq.s32.totalorder %s15, 0
    %p124 = por %p122, %p123
    %p125 = scmp.le.s32.totalorder 1, %s9
    %p126 = scmp.lt.s32.totalorder %s9, 3
    %p127 = pnand %p125, %p126
    %p128 = pneg %p127
    // Predicated region
    $region9: #{patch_embed_forward.3} parent=5 // pred_check
      _
    $region10: #{patch_embed_forward.3} parent=5 // pred_check_branch
      %130 = sbr.rel (%p127) target = $region12
    $region11: #{patch_embed_forward.3} parent=5 // pred_region
      %s131 = ssub.s32 %s9, 1
      // Predicated region
      $region13: #{patch_embed_forward.3} parent=11 // pred_check
        %p132 = pneg %p68
      $region14: #{patch_embed_forward.3} parent=11 // pred_check_branch
        %134 = sbr.rel (%p132) target = $region16
      $region15: #{patch_embed_forward.3} parent=11 // pred_region
        _
      $region16: #{patch_embed_forward.3} parent=11 // pred_fallthru
        _
      // Predicated region
      $region17: #{patch_embed_forward.3} parent=11 // pred_check
        %p135 = pneg %p89
      $region18: #{patch_embed_forward.3} parent=11 // pred_check_branch
        %137 = sbr.rel (%p135) target = $region20
      $region19: #{patch_embed_forward.3} parent=11 // pred_region
        _
      $region20: #{patch_embed_forward.3} parent=11 // pred_fallthru
        _
    $region12: #{patch_embed_forward.3} parent=5 // pred_fallthru
      _
    %p138 = scmp.lt.s32.totalorder %s9, 2
    // Predicated region
    $region21: #{patch_embed_forward.3} parent=5 // pred_check
      %p139 = pneg %p138
    $region22: #{patch_embed_forward.3} parent=5 // pred_check_branch
      %141 = sbr.rel (%p139) target = $region24
    $region23: #{patch_embed_forward.3} parent=5 // pred_region
      // Predicated region
      $region25: #{patch_embed_forward.3} parent=23 // pred_check
        %p142 = pneg %p41
      $region26: #{patch_embed_forward.3} parent=23 // pred_check_branch
        %144 = sbr.rel (%p142) target = $region28
      $region27: #{patch_embed_forward.3} parent=23 // pred_region
        %p145 = scmp.lt.s32.totalorder %s16, 1
        %s146 = scalar_select %p145, %s16, 1
        %s147 = smul.addr %s146, 10
        %s148 = smul.addr %s147, 4
        %s149 = scalar_lea.vmem %s0, %s148
      $region28: #{patch_embed_forward.3} parent=23 // pred_fallthru
        _
    $region24: #{patch_embed_forward.3} parent=5 // pred_fallthru
      _
    %p150 = scmp.le.s32.totalorder 1, %s9
    %p151 = scmp.lt.s32.totalorder %s9, 3
    %p152 = pnand %p150, %p151
    %p153 = pneg %p152
    // Predicated region
    $region29: #{patch_embed_forward.3} parent=5 // pred_check
      _
    $region30: #{patch_embed_forward.3} parent=5 // pred_check_branch
      %155 = sbr.rel (%p152) target = $region32
    $region31: #{patch_embed_forward.3} parent=5 // pred_region
      %s156 = ssub.s32 %s9, 1
      %p157 = scmp.lt.s32.totalorder %s18, 1
      %s158 = scalar_select %p157, %s18, 1
      %s159 = smul.addr %s158, 10
      %s160 = smul.addr %s159, 4
      %s161 = scalar_lea.vmem %s0, %s160
      %p162 = pneg %p47
      %p163 = pneg %p44
      %p164 = pneg %p68
      %p165 = pneg %p65
      %p166 = pneg %p89
      %p167 = pneg %p86
      %p168 = pneg %p117
      %p169 = pneg %p114
      %s170 = smul.u32 4, %s19
      %p171 = scmp.lt.s32.totalorder %s18, 1
      %s172 = scalar_select %p171, %s18, 1
      %p173 = scmp.lt.s32.totalorder %s170, 3
      %s174 = scalar_select %p173, %s170, 3
      %s175 = smul.addr %s172, 4
      %s176 = sadd.s32 %s174, %s175
      %s177 = smul.addr %s176, 8
      %s178 = scalar_lea.vmem %s3, %s177
      %p179 = scmp.lt.s32.totalorder %s18, 1
      %s180 = scalar_select %p179, %s18, 1
      %s181 = smul.addr %s180, 10
      %s182 = smul.addr %s181, 4
      %s183 = scalar_lea.vmem %s0, %s182
      %s184 = smul.u32 4, %s19
      %p185 = scmp.lt.s32.totalorder %s18, 1
      %s186 = scalar_select %p185, %s18, 1
      %p187 = scmp.lt.s32.totalorder %s184, 3
      %s188 = scalar_select %p187, %s184, 3
      %s189 = smul.addr %s186, 4
      %s190 = sadd.s32 %s188, %s189
      %s191 = smul.addr %s190, 8
      %s192 = scalar_lea.vmem %s3, %s191
      %s193 = smul.u32 4, %s19
      %s195 = smul.u32 %s19, 4
      %s196 = smul.u32 %s195, 2
      %s197 = smul.addr %s196, 4
      %s198 = scalar_lea.vmem %s183, %s197
      %v199 = vld [vmem:[%s198] sm:$0xf]
      %v200 = vld [vmem:[%s198 + $0x8] sm:$0xf]
      %v201 = vld [vmem:[%s198 + $0x10] sm:$0xf]
      %v202 = vld [vmem:[%s198 + $0x18] sm:$0xf]
      %v203 = vld [vmem:[%s1] sm:$0xf]
      %v204 = vld [vmem:[%s1 + $0x4] sm:$0xf]
      %v205 = vld [vmem:[%s1 + $0x8] sm:$0xf]
      %v206 = vld [vmem:[%s1 + $0xc] sm:$0xf]
      %v207 = vld [vmem:[%s1 + $0x10] sm:$0xf]
      %v208 = vld [vmem:[%s1 + $0x14] sm:$0xf]
      %v209 = vld [vmem:[%s1 + $0x18] sm:$0xf]
      %v210 = vld [vmem:[%s1 + $0x1c] sm:$0xf]
      %v211 = vld [vmem:[%s1 + $0x20] sm:$0xf]
      %v212 = vld [vmem:[%s1 + $0x24] sm:$0xf]
      %v213 = vld [vmem:[%s1 + $0x28] sm:$0xf]
      %v214 = vld [vmem:[%s1 + $0x2c] sm:$0xf]
      %v215 = vld [vmem:[%s1 + $0x30] sm:$0xf]
      %v216 = vld [vmem:[%s1 + $0x34] sm:$0xf]
      %v217 = vld [vmem:[%s1 + $0x38] sm:$0xf]
      %v218 = vld [vmem:[%s1 + $0x3c] sm:$0xf]
      %v219 = vld [vmem:[%s198 + $0x4] sm:$0x1]
      %v220 = vld [vmem:[%s198 + $0xc] sm:$0x1]
      %v221 = vld [vmem:[%s198 + $0x14] sm:$0x1]
      %v222 = vld [vmem:[%s198 + $0x1c] sm:$0x1]
      %vm223 = vsmask.f32 3328
      %vm224 = vsmask.f32 7440
      %vm225 = vmor %vm223, %vm224
      %v227 = vshrl.u32 %v199, 16
      %v229 = vrot.slane %v227, 4
      %v230 = vshll.u32 %v199, 16
      %v232 = vrot.slane %v230, 5
      %v233 = vor.u32 %v229, %v232
      %v234 = vrot.slane %v233, 4
      %v236 = vshll.u32 %v219, 16
      %v238 = vrot.slane %v236, 5
      %v239 = vsel %vm225, %v234, %v238
      %v241 = vshrl.u32 %v200, 16
      %v243 = vrot.slane %v241, 4
      %v244 = vshll.u32 %v200, 16
      %v246 = vrot.slane %v244, 5
      %v247 = vor.u32 %v243, %v246
      %v248 = vrot.slane %v247, 4
      %v250 = vshll.u32 %v220, 16
      %v252 = vrot.slane %v250, 5
      %v253 = vsel %vm225, %v248, %v252
      %v255 = vshrl.u32 %v201, 16
      %v257 = vrot.slane %v255, 4
      %v258 = vshll.u32 %v201, 16
      %v260 = vrot.slane %v258, 5
      %v261 = vor.u32 %v257, %v260
      %v262 = vrot.slane %v261, 4
      %v264 = vshll.u32 %v221, 16
      %v266 = vrot.slane %v264, 5
      %v267 = vsel %vm225, %v262, %v266
      %v269 = vshrl.u32 %v202, 16
      %v271 = vrot.slane %v269, 4
      %v272 = vshll.u32 %v202, 16
      %v274 = vrot.slane %v272, 5
      %v275 = vor.u32 %v271, %v274
      %v276 = vrot.slane %v275, 4
      %v278 = vshll.u32 %v222, 16
      %v280 = vrot.slane %v278, 5
      %v281 = vsel %vm225, %v276, %v280
      %s282 = scalar_lea.vmem %s1, 64
      %v283 = vld [vmem:[%s282] sm:$0xf]
      %v284 = vld [vmem:[%s282 + $0x4] sm:$0xf]
      %v285 = vld [vmem:[%s282 + $0x8] sm:$0xf]
      %v286 = vld [vmem:[%s282 + $0xc] sm:$0xf]
      %v287 = vld [vmem:[%s282 + $0x10] sm:$0xf]
      %v288 = vld [vmem:[%s282 + $0x14] sm:$0xf]
      %v289 = vld [vmem:[%s282 + $0x18] sm:$0xf]
      %v290 = vld [vmem:[%s282 + $0x1c] sm:$0xf]
      %v291 = vld [vmem:[%s282 + $0x20] sm:$0xf]
      %v292 = vld [vmem:[%s282 + $0x24] sm:$0xf]
      %v293 = vld [vmem:[%s282 + $0x28] sm:$0xf]
      %v294 = vld [vmem:[%s282 + $0x2c] sm:$0xf]
      %v295 = vld [vmem:[%s282 + $0x30] sm:$0xf]
      %v296 = vld [vmem:[%s282 + $0x34] sm:$0xf]
      %v297 = vld [vmem:[%s282 + $0x38] sm:$0xf]
      %v298 = vld [vmem:[%s282 + $0x3c] sm:$0xf]
      %v299 = vunpack.c.l.b16 %v239
      %v300 = vunpack.c.l.b16 %v253
      %v301 = vunpack.c.l.b16 %v267
      %v302 = vunpack.c.l.b16 %v281
      %v303 = vpack.c.b16 %v300, %v299
      %v304 = vpack.c.b16 %v302, %v301
      %v323 = vunpack.c.l.b16 %v283
      %v324 = vunpack.c.l.b16 %v284
      %v325 = vunpack.c.l.b16 %v285
      %v326 = vunpack.c.l.b16 %v286
      %v327 = vunpack.c.l.b16 %v287
      %v328 = vunpack.c.l.b16 %v288
      %v329 = vunpack.c.l.b16 %v289
      %v330 = vunpack.c.l.b16 %v290
      %v331 = vunpack.c.l.b16 %v291
      %v332 = vunpack.c.l.b16 %v292
      %v333 = vunpack.c.l.b16 %v293
      %v334 = vunpack.c.l.b16 %v294
      %v335 = vunpack.c.l.b16 %v295
      %v336 = vunpack.c.l.b16 %v296
      %v337 = vunpack.c.l.b16 %v297
      %v338 = vunpack.c.l.b16 %v298
      %v339 = vpack.c.b16 %v324, %v323
      %v340 = vpack.c.b16 %v326, %v325
      %v341 = vpack.c.b16 %v328, %v327
      %v342 = vpack.c.b16 %v330, %v329
      %v343 = vpack.c.b16 %v332, %v331
      %v344 = vpack.c.b16 %v334, %v333
      %v345 = vpack.c.b16 %v336, %v335
      %v346 = vpack.c.b16 %v338, %v337
      %355 = vmatprep.subr.bf16.mxu0 0
      %356 = vmatpush1.bf16.msra.mxu0 %v339
      %357 = vmatprep.subr.bf16.mxu0 0
      %358 = vmatpush1.bf16.msra.mxu0 %v340
      %359 = vmatprep.subr.bf16.mxu0 0
      %360 = vmatpush1.bf16.msra.mxu0 %v341
      %361 = vmatprep.subr.bf16.mxu0 0
      %362 = vmatpush1.bf16.msra.mxu0 %v342
      %363 = vmatprep.subr.bf16.mxu0 0
      %364 = vmatpush1.bf16.msra.mxu0 %v343
      %365 = vmatprep.subr.bf16.mxu0 0
      %366 = vmatpush1.bf16.msra.mxu0 %v344
      %367 = vmatprep.subr.bf16.mxu0 0
      %368 = vmatpush1.bf16.msra.mxu0 %v345
      %369 = vmatprep.subr.bf16.mxu0 0
      %370 = vmatpush1.bf16.msra.mxu0 %v346
      %371 = vmatprep.subr.bf16.mxu0 0
      %372 = vmatpush1.bf16.msra.mxu0 0
      %373 = vmatprep.subr.bf16.mxu0 0
      %374 = vmatpush1.bf16.msra.mxu0 0
      %375 = vmatprep.subr.bf16.mxu0 0
      %376 = vmatpush1.bf16.msra.mxu0 0
      %377 = vmatprep.subr.bf16.mxu0 0
      %378 = vmatpush1.bf16.msra.mxu0 0
      %379 = vmatprep.subr.bf16.mxu0 0
      %380 = vmatpush1.bf16.msra.mxu0 0
      %381 = vmatprep.subr.bf16.mxu0 0
      %382 = vmatpush1.bf16.msra.mxu0 0
      %383 = vmatprep.subr.bf16.mxu0 0
      %384 = vmatpush1.bf16.msra.mxu0 0
      %385 = vmatprep.subr.bf16.mxu0 0
      %386 = vmatpush1.bf16.msra.mxu0 0
      %387 = vmatprep.mubr.bf16.mxu0 0
      %388 = vmatmul.mubr.bf16.gmra.mrb[0].mxu0 %v303
      %v389 = vpop.f32.mrb[0].mxu0
      %v390 = vadd.f32 0.0, %v389
      %v391 = vpop.f32.mrb[0].mxu0
      %v392 = vpop.f32.mrb[0].mxu0
      %v393 = vadd.f32 0.0, %v392
      %v394 = vpop.f32.mrb[0].mxu0
      %395 = vmatprep.mubr.bf16.mxu0 0
      %396 = vmatmul.mubr.bf16.gmra.mrb[0].mxu0 %v304
      %v397 = vpop.f32.mrb[0].mxu0
      %v398 = vadd.f32 0.0, %v397
      %v399 = vpop.f32.mrb[0].mxu0
      %v400 = vpop.f32.mrb[0].mxu0
      %v401 = vadd.f32 0.0, %v400
      %v402 = vpop.f32.mrb[0].mxu0
      %403 = vdwg.mxu0
      %v408 = vunpack.c.l.b16 %v199
      %v409 = vunpack.c.l.b16 %v200
      %v410 = vunpack.c.l.b16 %v201
      %v411 = vunpack.c.l.b16 %v202
      %v412 = vpack.c.b16 %v409, %v408
      %v413 = vpack.c.b16 %v411, %v410
      %v432 = vunpack.c.l.b16 %v203
      %v433 = vunpack.c.l.b16 %v204
      %v434 = vunpack.c.l.b16 %v205
      %v435 = vunpack.c.l.b16 %v206
      %v436 = vunpack.c.l.b16 %v207
      %v437 = vunpack.c.l.b16 %v208
      %v438 = vunpack.c.l.b16 %v209
      %v439 = vunpack.c.l.b16 %v210
      %v440 = vunpack.c.l.b16 %v211
      %v441 = vunpack.c.l.b16 %v212
      %v442 = vunpack.c.l.b16 %v213
      %v443 = vunpack.c.l.b16 %v214
      %v444 = vunpack.c.l.b16 %v215
      %v445 = vunpack.c.l.b16 %v216
      %v446 = vunpack.c.l.b16 %v217
      %v447 = vunpack.c.l.b16 %v218
      %v448 = vpack.c.b16 %v433, %v432
      %v449 = vpack.c.b16 %v435, %v434
      %v450 = vpack.c.b16 %v437, %v436
      %v451 = vpack.c.b16 %v439, %v438
      %v452 = vpack.c.b16 %v441, %v440
      %v453 = vpack.c.b16 %v443, %v442
      %v454 = vpack.c.b16 %v445, %v444
      %v455 = vpack.c.b16 %v447, %v446
      %464 = vmatprep.subr.bf16.mxu0 0
      %465 = vmatpush1.bf16.msra.mxu0 %v448
      %466 = vmatprep.subr.bf16.mxu0 0
      %467 = vmatpush1.bf16.msra.mxu0 %v449
      %468 = vmatprep.subr.bf16.mxu0 0
      %469 = vmatpush1.bf16.msra.mxu0 %v450
      %470 = vmatprep.subr.bf16.mxu0 0
      %471 = vmatpush1.bf16.msra.mxu0 %v451
      %472 = vmatprep.subr.bf16.mxu0 0
      %473 = vmatpush1.bf16.msra.mxu0 %v452
      %474 = vmatprep.subr.bf16.mxu0 0
      %475 = vmatpush1.bf16.msra.mxu0 %v453
      %476 = vmatprep.subr.bf16.mxu0 0
      %477 = vmatpush1.bf16.msra.mxu0 %v454
      %478 = vmatprep.subr.bf16.mxu0 0
      %479 = vmatpush1.bf16.msra.mxu0 %v455
      %480 = vmatprep.subr.bf16.mxu0 0
      %481 = vmatpush1.bf16.msra.mxu0 0
      %482 = vmatprep.subr.bf16.mxu0 0
      %483 = vmatpush1.bf16.msra.mxu0 0
      %484 = vmatprep.subr.bf16.mxu0 0
      %485 = vmatpush1.bf16.msra.mxu0 0
      %486 = vmatprep.subr.bf16.mxu0 0
      %487 = vmatpush1.bf16.msra.mxu0 0
      %488 = vmatprep.subr.bf16.mxu0 0
      %489 = vmatpush1.bf16.msra.mxu0 0
      %490 = vmatprep.subr.bf16.mxu0 0
      %491 = vmatpush1.bf16.msra.mxu0 0
      %492 = vmatprep.subr.bf16.mxu0 0
      %493 = vmatpush1.bf16.msra.mxu0 0
      %494 = vmatprep.subr.bf16.mxu0 0
      %495 = vmatpush1.bf16.msra.mxu0 0
      %496 = vmatprep.mubr.bf16.mxu0 0
      %497 = vmatmul.mubr.bf16.gmra.mrb[0].mxu0 %v412
      %v498 = vpop.f32.mrb[0].mxu0
      %v499 = vadd.f32 %v390, %v498
      %v500 = vpop.f32.mrb[0].mxu0
      %v501 = vpop.f32.mrb[0].mxu0
      %v502 = vadd.f32 %v393, %v501
      %v503 = vpop.f32.mrb[0].mxu0
      %504 = vmatprep.mubr.bf16.mxu0 0
      %505 = vmatmul.mubr.bf16.gmra.mrb[0].mxu0 %v413
      %v506 = vpop.f32.mrb[0].mxu0
      %v507 = vadd.f32 %v398, %v506
      %v508 = vpop.f32.mrb[0].mxu0
      %v509 = vpop.f32.mrb[0].mxu0
      %v510 = vadd.f32 %v401, %v509
      %v511 = vpop.f32.mrb[0].mxu0
      %512 = vdwg.mxu0
      %s513 = sadd.s32 %s195, 1
      %s514 = smul.u32 %s513, 2
      %s515 = smul.addr %s514, 4
      %s516 = scalar_lea.vmem %s183, %s515
      %v517 = vld [vmem:[%s516] sm:$0xf]
      %v518 = vld [vmem:[%s516 + $0x8] sm:$0xf]
      %v519 = vld [vmem:[%s516 + $0x10] sm:$0xf]
      %v520 = vld [vmem:[%s516 + $0x18] sm:$0xf]
      %s521 = scalar_lea.vmem %s1, 128
      %v522 = vld [vmem:[%s521] sm:$0xf]
      %v523 = vld [vmem:[%s521 + $0x4] sm:$0xf]
      %v524 = vld [vmem:[%s521 + $0x8] sm:$0xf]
      %v525 = vld [vmem:[%s521 + $0xc] sm:$0xf]
      %v526 = vld [vmem:[%s521 + $0x10] sm:$0xf]
      %v527 = vld [vmem:[%s521 + $0x14] sm:$0xf]
      %v528 = vld [vmem:[%s521 + $0x18] sm:$0xf]
      %v529 = vld [vmem:[%s521 + $0x1c] sm:$0xf]
      %v530 = vld [vmem:[%s521 + $0x20] sm:$0xf]
      %v531 = vld [vmem:[%s521 + $0x24] sm:$0xf]
      %v532 = vld [vmem:[%s521 + $0x28] sm:$0xf]
      %v533 = vld [vmem:[%s521 + $0x2c] sm:$0xf]
      %v534 = vld [vmem:[%s521 + $0x30] sm:$0xf]
      %v535 = vld [vmem:[%s521 + $0x34] sm:$0xf]
      %v536 = vld [vmem:[%s521 + $0x38] sm:$0xf]
      %v537 = vld [vmem:[%s521 + $0x3c] sm:$0xf]
      %v542 = vunpack.c.l.b16 %v517
      %v543 = vunpack.c.l.b16 %v518
      %v544 = vunpack.c.l.b16 %v519
      %v545 = vunpack.c.l.b16 %v520
      %v546 = vpack.c.b16 %v543, %v542
      %v547 = vpack.c.b16 %v545, %v544
      %v566 = vunpack.c.l.b16 %v522
      %v567 = vunpack.c.l.b16 %v523
      %v568 = vunpack.c.l.b16 %v524
      %v569 = vunpack.c.l.b16 %v525
      %v570 = vunpack.c.l.b16 %v526
      %v571 = vunpack.c.l.b16 %v527
      %v572 = vunpack.c.l.b16 %v528
      %v573 = vunpack.c.l.b16 %v529
      %v574 = vunpack.c.l.b16 %v530
      %v575 = vunpack.c.l.b16 %v531
      %v576 = vunpack.c.l.b16 %v532
      %v577 = vunpack.c.l.b16 %v533
      %v578 = vunpack.c.l.b16 %v534
      %v579 = vunpack.c.l.b16 %v535
      %v580 = vunpack.c.l.b16 %v536
      %v581 = vunpack.c.l.b16 %v537
      %v582 = vpack.c.b16 %v567, %v566
      %v583 = vpack.c.b16 %v569, %v568
      %v584 = vpack.c.b16 %v571, %v570
      %v585 = vpack.c.b16 %v573, %v572
      %v586 = vpack.c.b16 %v575, %v574
      %v587 = vpack.c.b16 %v577, %v576
      %v588 = vpack.c.b16 %v579, %v578
      %v589 = vpack.c.b16 %v581, %v580
      %598 = vmatprep.subr.bf16.mxu0 0
      %599 = vmatpush1.bf16.msra.mxu0 %v582
      %600 = vmatprep.subr.bf16.mxu0 0
      %601 = vmatpush1.bf16.msra.mxu0 %v583
      %602 = vmatprep.subr.bf16.mxu0 0
      %603 = vmatpush1.bf16.msra.mxu0 %v584
      %604 = vmatprep.subr.bf16.mxu0 0
      %605 = vmatpush1.bf16.msra.mxu0 %v585
      %606 = vmatprep.subr.bf16.mxu0 0
      %607 = vmatpush1.bf16.msra.mxu0 %v586
      %608 = vmatprep.subr.bf16.mxu0 0
      %609 = vmatpush1.bf16.msra.mxu0 %v587
      %610 = vmatprep.subr.bf16.mxu0 0
      %611 = vmatpush1.bf16.msra.mxu0 %v588
      %612 = vmatprep.subr.bf16.mxu0 0
      %613 = vmatpush1.bf16.msra.mxu0 %v589
      %614 = vmatprep.subr.bf16.mxu0 0
      %615 = vmatpush1.bf16.msra.mxu0 0
      %616 = vmatprep.subr.bf16.mxu0 0
      %617 = vmatpush1.bf16.msra.mxu0 0
      %618 = vmatprep.subr.bf16.mxu0 0
      %619 = vmatpush1.bf16.msra.mxu0 0
      %620 = vmatprep.subr.bf16.mxu0 0
      %621 = vmatpush1.bf16.msra.mxu0 0
      %622 = vmatprep.subr.bf16.mxu0 0
      %623 = vmatpush1.bf16.msra.mxu0 0
      %624 = vmatprep.subr.bf16.mxu0 0
      %625 = vmatpush1.bf16.msra.mxu0 0
      %626 = vmatprep.subr.bf16.mxu0 0
      %627 = vmatpush1.bf16.msra.mxu0 0
      %628 = vmatprep.subr.bf16.mxu0 0
      %629 = vmatpush1.bf16.msra.mxu0 0
      %630 = vmatprep.mubr.bf16.mxu0 0
      %631 = vmatmul.mubr.bf16.gmra.mrb[0].mxu0 %v546
      %v632 = vpop.f32.mrb[0].mxu0
      %v633 = vadd.f32 0.0, %v632
      %v634 = vpop.f32.mrb[0].mxu0
      %v635 = vpop.f32.mrb[0].mxu0
      %v636 = vadd.f32 0.0, %v635
      %v637 = vpop.f32.mrb[0].mxu0
      %638 = vmatprep.mubr.bf16.mxu0 0
      %639 = vmatmul.mubr.bf16.gmra.mrb[0].mxu0 %v547
      %v640 = vpop.f32.mrb[0].mxu0
      %v641 = vadd.f32 0.0, %v640
      %v642 = vpop.f32.mrb[0].mxu0
      %v643 = vpop.f32.mrb[0].mxu0
      %v644 = vadd.f32 0.0, %v643
      %v645 = vpop.f32.mrb[0].mxu0
      %646 = vdwg.mxu0
      %v647 = vadd.f32 %v499, %v633
      %v648 = vadd.f32 %v502, %v636
      %v649 = vadd.f32 %v507, %v641
      %v650 = vadd.f32 %v510, %v644
      %v651 = vld [vmem:[%s516] sm:$0xf]
      %v652 = vld [vmem:[%s516 + $0x4] sm:$0x1]
      %v653 = vld [vmem:[%s516 + $0x8] sm:$0xf]
      %v654 = vld [vmem:[%s516 + $0xc] sm:$0x1]
      %v655 = vld [vmem:[%s516 + $0x10] sm:$0xf]
      %v656 = vld [vmem:[%s516 + $0x14] sm:$0x1]
      %v657 = vld [vmem:[%s516 + $0x18] sm:$0xf]
      %v658 = vld [vmem:[%s516 + $0x1c] sm:$0x1]
      %v660 = vshrl.u32 %v651, 16
      %v662 = vrot.slane %v660, 4
      %v663 = vshll.u32 %v651, 16
      %v665 = vrot.slane %v663, 5
      %v666 = vor.u32 %v662, %v665
      %v667 = vrot.slane %v666, 4
      %v669 = vshll.u32 %v652, 16
      %v671 = vrot.slane %v669, 5
      %v672 = vsel %vm225, %v667, %v671
      %v674 = vshrl.u32 %v653, 16
      %v676 = vrot.slane %v674, 4
      %v677 = vshll.u32 %v653, 16
      %v679 = vrot.slane %v677, 5
      %v680 = vor.u32 %v676, %v679
      %v681 = vrot.slane %v680, 4
      %v683 = vshll.u32 %v654, 16
      %v685 = vrot.slane %v683, 5
      %v686 = vsel %vm225, %v681, %v685
      %v688 = vshrl.u32 %v655, 16
      %v690 = vrot.slane %v688, 4
      %v691 = vshll.u32 %v655, 16
      %v693 = vrot.slane %v691, 5
      %v694 = vor.u32 %v690, %v693
      %v695 = vrot.slane %v694, 4
      %v697 = vshll.u32 %v656, 16
      %v699 = vrot.slane %v697, 5
      %v700 = vsel %vm225, %v695, %v699
      %v702 = vshrl.u32 %v657, 16
      %v704 = vrot.slane %v702, 4
      %v705 = vshll.u32 %v657, 16
      %v707 = vrot.slane %v705, 5
      %v708 = vor.u32 %v704, %v707
      %v709 = vrot.slane %v708, 4
      %v711 = vshll.u32 %v658, 16
      %v713 = vrot.slane %v711, 5
      %v714 = vsel %vm225, %v709, %v713
      %s715 = scalar_lea.vmem %s1, 192
      %v716 = vld [vmem:[%s715] sm:$0xf]
      %v717 = vld [vmem:[%s715 + $0x4] sm:$0xf]
      %v718 = vld [vmem:[%s715 + $0x8] sm:$0xf]
      %v719 = vld [vmem:[%s715 + $0xc] sm:$0xf]
      %v720 = vld [vmem:[%s715 + $0x10] sm:$0xf]
      %v721 = vld [vmem:[%s715 + $0x14] sm:$0xf]
      %v722 = vld [vmem:[%s715 + $0x18] sm:$0xf]
      %v723 = vld [vmem:[%s715 + $0x1c] sm:$0xf]
      %v724 = vld [vmem:[%s715 + $0x20] sm:$0xf]
      %v725 = vld [vmem:[%s715 + $0x24] sm:$0xf]
      %v726 = vld [vmem:[%s715 + $0x28] sm:$0xf]
      %v727 = vld [vmem:[%s715 + $0x2c] sm:$0xf]
      %v728 = vld [vmem:[%s715 + $0x30] sm:$0xf]
      %v729 = vld [vmem:[%s715 + $0x34] sm:$0xf]
      %v730 = vld [vmem:[%s715 + $0x38] sm:$0xf]
      %v731 = vld [vmem:[%s715 + $0x3c] sm:$0xf]
      %v732 = vunpack.c.l.b16 %v672
      %v733 = vunpack.c.l.b16 %v686
      %v734 = vunpack.c.l.b16 %v700
      %v735 = vunpack.c.l.b16 %v714
      %v736 = vpack.c.b16 %v733, %v732
      %v737 = vpack.c.b16 %v735, %v734
      %v756 = vunpack.c.l.b16 %v716
      %v757 = vunpack.c.l.b16 %v717
      %v758 = vunpack.c.l.b16 %v718
      %v759 = vunpack.c.l.b16 %v719
      %v760 = vunpack.c.l.b16 %v720
      %v761 = vunpack.c.l.b16 %v721
      %v762 = vunpack.c.l.b16 %v722
      %v763 = vunpack.c.l.b16 %v723
      %v764 = vunpack.c.l.b16 %v724
      %v765 = vunpack.c.l.b16 %v725
      %v766 = vunpack.c.l.b16 %v726
      %v767 = vunpack.c.l.b16 %v727
      %v768 = vunpack.c.l.b16 %v728
      %v769 = vunpack.c.l.b16 %v729
      %v770 = vunpack.c.l.b16 %v730
      %v771 = vunpack.c.l.b16 %v731
      %v772 = vpack.c.b16 %v757, %v756
      %v773 = vpack.c.b16 %v759, %v758
      %v774 = vpack.c.b16 %v761, %v760
      %v775 = vpack.c.b16 %v763, %v762
      %v776 = vpack.c.b16 %v765, %v764
      %v777 = vpack.c.b16 %v767, %v766
      %v778 = vpack.c.b16 %v769, %v768
      %v779 = vpack.c.b16 %v771, %v770
      %788 = vmatprep.subr.bf16.mxu0 0
      %789 = vmatpush1.bf16.msra.mxu0 %v772
      %790 = vmatprep.subr.bf16.mxu0 0
      %791 = vmatpush1.bf16.msra.mxu0 %v773
      %792 = vmatprep.subr.bf16.mxu0 0
      %793 = vmatpush1.bf16.msra.mxu0 %v774
      %794 = vmatprep.subr.bf16.mxu0 0
      %795 = vmatpush1.bf16.msra.mxu0 %v775
      %796 = vmatprep.subr.bf16.mxu0 0
      %797 = vmatpush1.bf16.msra.mxu0 %v776
      %798 = vmatprep.subr.bf16.mxu0 0
      %799 = vmatpush1.bf16.msra.mxu0 %v777
      %800 = vmatprep.subr.bf16.mxu0 0
      %801 = vmatpush1.bf16.msra.mxu0 %v778
      %802 = vmatprep.subr.bf16.mxu0 0
      %803 = vmatpush1.bf16.msra.mxu0 %v779
      %804 = vmatprep.subr.bf16.mxu0 0
      %805 = vmatpush1.bf16.msra.mxu0 0
      %806 = vmatprep.subr.bf16.mxu0 0
      %807 = vmatpush1.bf16.msra.mxu0 0
      %808 = vmatprep.subr.bf16.mxu0 0
      %809 = vmatpush1.bf16.msra.mxu0 0
      %810 = vmatprep.subr.bf16.mxu0 0
      %811 = vmatpush1.bf16.msra.mxu0 0
      %812 = vmatprep.subr.bf16.mxu0 0
      %813 = vmatpush1.bf16.msra.mxu0 0
      %814 = vmatprep.subr.bf16.mxu0 0
      %815 = vmatpush1.bf16.msra.mxu0 0
      %816 = vmatprep.subr.bf16.mxu0 0
      %817 = vmatpush1.bf16.msra.mxu0 0
      %818 = vmatprep.subr.bf16.mxu0 0
      %819 = vmatpush1.bf16.msra.mxu0 0
      %820 = vmatprep.mubr.bf16.mxu0 0
      %821 = vmatmul.mubr.bf16.gmra.mrb[0].mxu0 %v736
      %v822 = vpop.f32.mrb[0].mxu0
      %v823 = vadd.f32 0.0, %v822
      %v824 = vpop.f32.mrb[0].mxu0
      %v825 = vpop.f32.mrb[0].mxu0
      %v826 = vadd.f32 0.0, %v825
      %v827 = vpop.f32.mrb[0].mxu0
      %828 = vmatprep.mubr.bf16.mxu0 0
      %829 = vmatmul.mubr.bf16.gmra.mrb[0].mxu0 %v737
      %v830 = vpop.f32.mrb[0].mxu0
      %v831 = vadd.f32 0.0, %v830
      %v832 = vpop.f32.mrb[0].mxu0
      %v833 = vpop.f32.mrb[0].mxu0
      %v834 = vadd.f32 0.0, %v833
      %v835 = vpop.f32.mrb[0].mxu0
      %836 = vdwg.mxu0
      %v837 = vadd.f32 %v647, %v823
      %v838 = vadd.f32 %v648, %v826
      %v839 = vadd.f32 %v649, %v831
      %v840 = vadd.f32 %v650, %v834
      %v841 = vld [vmem:[%s2] sm:$0x1]
      %v843 = vlaneseq
      %v844 = vshrl.u32 %v843, 7
      %v845 = vsub.s32 0, %v844
      %v846 = vrot.slane %v841, %v845
      %v848 = vadd.f32 %v837, %v846
      %v849 = vadd.f32 %v838, %v846
      %v850 = vadd.f32 %v839, %v846
      %v851 = vadd.f32 %v840, %v846
      %v852 = vmax.f32 %v848, 0.0
      %v853 = vmax.f32 %v849, 0.0
      %v854 = vmax.f32 %v850, 0.0
      %v855 = vmax.f32 %v851, 0.0
      %vm856 = vcmask 261120
      %857 = vst.msk [vmem:[%s192] sm:$0xff] %vm856, %v852
      %858 = vst.msk [vmem:[%s192 + $0x8] sm:$0xff] %vm856, %v853
      %859 = vst.msk [vmem:[%s192 + $0x10] sm:$0xff] %vm856, %v854
      %860 = vst.msk [vmem:[%s192 + $0x18] sm:$0xff] %vm856, %v855
      %s861 = smul.u32 4, %s19
      %p862 = scmp.lt.s32.totalorder %s18, 1
      %s863 = scalar_select %p862, %s18, 1
      %p864 = scmp.lt.s32.totalorder %s861, 3
      %s865 = scalar_select %p864, %s861, 3
      %s866 = smul.addr %s863, 4
      %s867 = sadd.s32 %s865, %s866
      %s868 = smul.addr %s867, 8
      %s869 = scalar_lea.vmem %s3, %s868
      // Predicated region
      $region33: #{patch_embed_forward.3} parent=31 // pred_check
        %p870 = pneg %p114
      $region34: #{patch_embed_forward.3} parent=31 // pred_check_branch
        %872 = sbr.rel (%p870) target = $region36
      $region35: #{patch_embed_forward.3} parent=31 // pred_region
        %s873 = smul.u32 4, %s19
      $region36: #{patch_embed_forward.3} parent=31 // pred_fallthru
        _
    $region32: #{patch_embed_forward.3} parent=5 // pred_fallthru
      _
    %p874 = scmp.le.s32.totalorder 2, %s9
    // Predicated region
    $region37: #{patch_embed_forward.3} parent=5 // pred_check
      %p875 = pneg %p874
    $region38: #{patch_embed_forward.3} parent=5 // pred_check_branch
      %877 = sbr.rel (%p875) target = $region40
    $region39: #{patch_embed_forward.3} parent=5 // pred_region
      %s878 = ssub.s32 %s9, 2
      // Predicated region
      $region41: #{patch_embed_forward.3} parent=39 // pred_check
        %p879 = pneg %p120
      $region42: #{patch_embed_forward.3} parent=39 // pred_check_branch
        %881 = sbr.rel (%p879) target = $region44
      $region43: #{patch_embed_forward.3} parent=39 // pred_region
        %s882 = smul.u32 4, %s21
        %p883 = scmp.lt.s32.totalorder %s20, 1
        %s884 = scalar_select %p883, %s20, 1
        %p885 = scmp.lt.s32.totalorder %s882, 3
        %s886 = scalar_select %p885, %s882, 3
        %s887 = smul.addr %s884, 4
        %s888 = sadd.s32 %s886, %s887
        %s889 = smul.addr %s888, 8
        %s890 = scalar_lea.vmem %s3, %s889
      $region44: #{patch_embed_forward.3} parent=39 // pred_fallthru
        _
    $region40: #{patch_embed_forward.3} parent=5 // pred_fallthru
      _
  $region6: #{patch_embed_forward.3} parent=0 // loop_footer
    %s13 = sadd.s32 1, %s9
  $region7: #{patch_embed_forward.3} parent=0 // loop_footer_branch
    %8 = sbr.rel target = $region3
  $region8: #{patch_embed_forward.3} parent=0 // loop_exit
    _

</llo_original>
